<compile_context>
chip_gen: v7x
topology: tpu7x:2x2x1
jax: 0.10.0
libtpu: 0.0.40
codegen_flags: <defaults>
</compile_context>

<pallas_src>
import functools

import jax
import jax.numpy as jnp
from jax import lax
from jax.experimental import pallas as pl
from jax.experimental.pallas import tpu as pltpu


# ----------------------------------------------------------------------------
# Kernel 1: HCQT filterbank projection as one folded matmul
#   frames (NB*T, K) f32  x  fbank (K, H*Fp) bf16  -> |.| -> (NB*T, H*Fp) f32
# ----------------------------------------------------------------------------
def _hcqt_kernel_single(frames_ref, fbank_ref, o_ref):
    a = frames_ref[...].astype(jnp.bfloat16)          # in-kernel cast (hidden under MXU)
    acc = jnp.dot(a, fbank_ref[...], preferred_element_type=jnp.float32)
    # TODO(synk): |real projection| stands in for the complex CQT magnitude.
    o_ref[...] = jnp.abs(acc)


def _hcqt_kernel_multi(frames_ref, fbank_ref, o_ref, acc_ref):
    k = pl.program_id(1)

    @pl.when(k == 0)
    def _():
        acc_ref[...] = jnp.zeros_like(acc_ref)

    a = frames_ref[...].astype(jnp.bfloat16)
    acc_ref[...] += jnp.dot(a, fbank_ref[...], preferred_element_type=jnp.float32)

    @pl.when(k == pl.num_programs(1) - 1)
    def _():
        o_ref[...] = jnp.abs(acc_ref[...])


def _pick_tile_m(m):
    tm = min(128, m)
    while m % tm != 0:
        tm //= 2
    if m // tm < 2 and tm >= 16:                       # keep >=2 parallel steps (v7x 2 TCs)
        tm //= 2
    return max(tm, 8)


def hcqt_pallas(frames, fbank):
    """frames: (NB, T, K) f32, fbank: (H, K, Fb)  ->  ((NB*T, H*Fp) f32, Fp)."""
    NB, T, K = frames.shape
    H, K2, Fb = fbank.shape
    assert K == K2
    Fp = ((Fb + 127) // 128) * 128                     # lane-dense bins (96 -> 128)
    N = H * Fp
    M = NB * T
    assert M % 8 == 0

    # weight-side prep (tiny, once): pad bins, fold harmonics into N, cast bf16
    fb = jnp.pad(fbank.astype(jnp.float32), ((0, 0), (0, 0), (0, Fp - Fb)))
    fb = jnp.transpose(fb, (1, 0, 2)).reshape(K, N).astype(jnp.bfloat16)
    x = frames.reshape(M, K)                           # free reshape; stays f32 in HBM

    tm = _pick_tile_m(M)
    tk = K if K <= 512 else 512
    assert K % tk == 0, "frame_len must be a multiple of the K tile"
    kt = K // tk
    cp = pltpu.CompilerParams(
        dimension_semantics=("parallel",) if kt == 1 else ("parallel", "arbitrary"),
        vmem_limit_bytes=32 * 1024 * 1024)

    if kt == 1:
        out = pl.pallas_call(
            _hcqt_kernel_single,
            out_shape=jax.ShapeDtypeStruct((M, N), jnp.float32),
            grid_spec=pltpu.PrefetchScalarGridSpec(
                num_scalar_prefetch=0,
                grid=(M // tm,),
                in_specs=[
                    pl.BlockSpec((tm, K), lambda i: (i, 0)),
                    pl.BlockSpec((K, N), lambda i: (0, 0)),
                ],
                out_specs=pl.BlockSpec((tm, N), lambda i: (i, 0))),
            compiler_params=cp,
        )(x, fb)
    else:
        out = pl.pallas_call(
            _hcqt_kernel_multi,
            out_shape=jax.ShapeDtypeStruct((M, N), jnp.float32),
            grid_spec=pltpu.PrefetchScalarGridSpec(
                num_scalar_prefetch=0,
                grid=(M // tm, kt),
                in_specs=[
                    pl.BlockSpec((tm, tk), lambda i, k: (i, k)),
                    pl.BlockSpec((tk, N), lambda i, k: (k, 0)),
                ],
                out_specs=pl.BlockSpec((tm, N), lambda i, k: (i, 0)),
                scratch_shapes=[pltpu.VMEM((tm, N), jnp.float32)]),
            compiler_params=cp,
        )(x, fb)
    return out, Fp


# ----------------------------------------------------------------------------
# Kernel 2: fused crop (scalar prefetch) + ChromaNet + octave-pool epilogue.
# Channels are stacked on sublanes; convs are MXU matmuls against kron-folded weights.
# ----------------------------------------------------------------------------
def _chromanet_kernel(src_ref, start_ref, x_ref, w1f_ref, w2f_ref, wclsT_ref,
                      mt_ref, moct_ref, y_ref, pool_ref, *,
                      cin, t, f_stride, nb, inv_temp):
    del src_ref                                        # used only by the index_map
    b = pl.program_id(0)
    start = start_ref[b]                               # crop start for this grid step

    # --- stack harmonic planes on the sublane axis: (cin*t, f_stride)
    xfull = x_ref[...]                                 # (t, cin*f_stride)
    planes = [xfull[:, h * f_stride:(h + 1) * f_stride] for h in range(cin)]
    x_stack = jnp.concatenate(planes, axis=0)

    # --- dynamic crop as a selection matmul (no dynamic lane slicing)
    j = lax.broadcasted_iota(jnp.int32, (f_stride, nb), 0)
    f = lax.broadcasted_iota(jnp.int32, (f_stride, nb), 1)
    csel = (j == f + start).astype(jnp.float32)        # (f_stride, nb)
    xc = jnp.dot(x_stack, csel, preferred_element_type=jnp.float32)   # (cin*t, nb)

    # --- octave-pool epilogue (mean over time, mean over octaves) as two matmuls
    pm = jnp.dot(mt_ref[...], xc, preferred_element_type=jnp.float32)           # (cin, nb)
    pool_ref[0] = jnp.dot(pm, moct_ref[...], preferred_element_type=jnp.float32)  # (cin, 12)

    # --- 'same' 3x3 conv: time shift + channel contraction folded into the weights,
    #     only the bin (lane) shift is done on the activations (zero padded).
    def shifted(xarr, dj):
        rows = xarr.shape[0]
        zcol = jnp.zeros((rows, 1), jnp.float32)
        xp = jnp.concatenate([zcol, xarr, zcol], axis=1)        # (rows, nb+2)
        return xp[:, dj:dj + nb]

    def conv_relu(xarr, wf_ref):
        acc = jnp.dot(wf_ref[1], xarr, preferred_element_type=jnp.float32)
        acc = acc + jnp.dot(wf_ref[0], shifted(xarr, 0), preferred_element_type=jnp.float32)
        acc = acc + jnp.dot(wf_ref[2], shifted(xarr, 2), preferred_element_type=jnp.float32)
        return jnp.maximum(acc, 0.0)

    h1 = conv_relu(xc, w1f_ref)                        # (c1*t, nb)
    h2 = conv_relu(h1, w2f_ref)                        # (c2*t, nb)

    # --- global mean pool folded into the classifier (wclsT pre-scaled by 1/(t*nb))
    hsum = jnp.sum(h2, axis=1, keepdims=True)          # (c2*t, 1)
    logits = jnp.dot(wclsT_ref[...], hsum, preferred_element_type=jnp.float32)   # (12, 1)

    # --- temperature softmax
    z = logits * inv_temp
    z = z - jnp.max(z, axis=0, keepdims=True)
    e = jnp.exp(z)
    y_ref[0] = e / jnp.sum(e, axis=0, keepdims=True)   # (12, 1)


def _fold_conv_weights(w, T):
    """(cout, cin, 3, 3) -> (3, cout*T, cin*T): time shift + channel contraction folded."""
    cout, cin, kh, kw = w.shape
    assert kh == 3 and kw == 3
    w = w.astype(jnp.float32)
    ti = jnp.arange(T)
    mats = []
    for dj in range(3):
        m = jnp.zeros((cout * T, cin * T), jnp.float32)
        for di in range(3):
            s = (ti[None, :] == ti[:, None] + (di - 1)).astype(jnp.float32)   # (T, T)
            m = m + jnp.kron(w[:, :, di, dj], s)
        mats.append(m)
    return jnp.stack(mats, axis=0)


def chromanet_pallas(hcqt_flat, src_idx, crop_start, w1, w2, wf, *,
                     n_frames, n_harm, f_stride, n_bins, n_oct, temperature):
    """hcqt_flat: (2B*T, H*Fp); returns (y (N3, 12), pooled (N3, H, 12))."""
    T = n_frames
    cin = n_harm
    c1, c2 = w1.shape[0], w2.shape[0]
    assert w1.shape == (c1, cin, 3, 3) and w2.shape == (c2, c1, 3, 3)
    assert wf.shape == (c2, 12) and n_bins == n_oct * 12
    M, ncols = hcqt_flat.shape
    assert ncols == cin * f_stride and M % T == 0
    N3 = src_idx.shape[0]

    # constant fold matrices (tiny, built once per call in the wrapper)
    w1f = _fold_conv_weights(w1, T)                                        # (3, c1*T, cin*T)
    w2f = _fold_conv_weights(w2, T)                                        # (3, c2*T, c1*T)
    wclsT = jnp.repeat(wf.astype(jnp.float32).T, T, axis=1) / float(T * n_bins)  # (12, c2*T)
    mt = jnp.kron(jnp.eye(cin, dtype=jnp.float32),
                  jnp.full((1, T), 1.0 / T, jnp.float32))                  # (cin, cin*T)
    moct = jnp.tile(jnp.eye(12, dtype=jnp.float32), (n_oct, 1)) / float(n_oct)   # (n_bins, 12)

    kernel = functools.partial(
        _chromanet_kernel, cin=cin, t=T, f_stride=f_stride, nb=n_bins,
        inv_temp=1.0 / float(temperature))

    y3, pooled = pl.pallas_call(
        kernel,
        out_shape=(jax.ShapeDtypeStruct((N3, 12, 1), jnp.float32),
                   jax.ShapeDtypeStruct((N3, cin, 12), jnp.float32)),
        grid_spec=pltpu.PrefetchScalarGridSpec(
            num_scalar_prefetch=2,
            grid=(N3,),
            in_specs=[
                pl.BlockSpec((T, ncols), lambda b, src, st: (src[b], 0)),
                pl.BlockSpec((3, c1 * T, cin * T), lambda b, src, st: (0, 0, 0)),
                pl.BlockSpec((3, c2 * T, c1 * T), lambda b, src, st: (0, 0, 0)),
                pl.BlockSpec((12, c2 * T), lambda b, src, st: (0, 0)),
                pl.BlockSpec((cin, cin * T), lambda b, src, st: (0, 0)),
                pl.BlockSpec((n_bins, 12), lambda b, src, st: (0, 0)),
            ],
            out_specs=(
                pl.BlockSpec((1, 12, 1), lambda b, src, st: (b, 0, 0)),
                pl.BlockSpec((1, cin, 12), lambda b, src, st: (b, 0, 0)),
            )),
        compiler_params=pltpu.CompilerParams(dimension_semantics=("parallel",)),
    )(src_idx, crop_start, hcqt_flat, w1f, w2f, wclsT, mt, moct)
    return y3[:, :, 0], pooled


# ----------------------------------------------------------------------------
# Stone forward
# ----------------------------------------------------------------------------
def stone_forward(params, audio, rand_key, *, n_bins, bins_before, n_harmonics,
                  frame_len, temperature):
    del bins_before
    B, n_samples, n_src = audio.shape
    assert n_src == 2
    s1 = audio[:, :, 0]
    s2 = audio[:, :, 1]

    # --- HCQT (Pallas kernel 1): one folded matmul over all batch/harmonics/frames
    sig = jnp.concatenate((s1, s2), axis=0)                     # (2B, n_samples)
    n_frames = n_samples // frame_len
    frames = sig[:, :n_frames * frame_len].reshape(2 * B, n_frames, frame_len)
    hcqt_flat, f_stride = hcqt_pallas(frames, params["fbank"])  # (2B*T, H*128)

    # --- random transpositions (torch.randint replaced by jax.random, explicit key)
    k1, k2 = jax.random.split(rand_key)
    to_transpose = jax.random.randint(k1, (B,), 1, 12)          # 1..11
    original = jax.random.randint(k2, (B,), 1, 13)              # 1..12
    transpose = (to_transpose + original) % 12
    difference = transpose - original

    # --- crop + concat fused into kernel 2 via scalar prefetch (no HBM intermediate)
    src_idx = jnp.concatenate([jnp.arange(2 * B, dtype=jnp.int32),
                               jnp.arange(B, dtype=jnp.int32)])
    crop_start = jnp.concatenate([original, original, transpose]).astype(jnp.int32)

    y, pooled = chromanet_pallas(
        hcqt_flat, src_idx, crop_start,
        params["w1"], params["w2"], params["wf"],
        n_frames=n_frames, n_harm=n_harmonics, f_stride=f_stride,
        n_bins=n_bins, n_oct=n_bins // 12, temperature=temperature)

    mean_hcqt = 0.5 * (pooled[:B] + pooled[B:2 * B])            # (B, H, 12)
    return y, difference, mean_hcqt


# ----------------------------------------------------------------------------
# Deterministic parameter construction + demo
# ----------------------------------------------------------------------------
def make_params(key, *, frame_len, n_harmonics, bins_before, out_channels, kernels):
    assert list(kernels) == [3, 3], "synthetic ChromaNet uses 3x3 kernels"
    k0, k1, k2, k3 = jax.random.split(key, 4)
    return {
        "fbank": 0.05 * jax.random.normal(
            k0, (n_harmonics, frame_len, bins_before), jnp.float32),
        "w1": 0.1 * jax.random.normal(
            k1, (out_channels[0], n_harmonics, 3, 3), jnp.float32),
        "w2": 0.1 * jax.random.normal(
            k2, (out_channels[1], out_channels[0], 3, 3), jnp.float32),
        "wf": 0.1 * jax.random.normal(k3, (out_channels[1], 12), jnp.float32),
    }


if __name__ == "__main__":
    # Small, Stone-consistent configuration
    B = 2                    # batch
    n_samples = 2048         # audio samples
    n_harmonics = 2          # len(hcqt.harmonics)
    bins_before = 96         # hcqt.n_bins (8 octaves * 12)
    n_bins = 84              # cropped bins (7 octaves * 12)
    frame_len = 256          # -> 8 time frames
    out_channels = [8, 16]
    kernels = [3, 3]
    temperature = 0.1

    root = jax.random.PRNGKey(0)
    k_audio, k_params, k_rand = jax.random.split(root, 3)

    audio = jax.random.normal(k_audio, (B, n_samples, 2), jnp.float32)  # (B, T, 2)
    params = make_params(k_params, frame_len=frame_len, n_harmonics=n_harmonics,
                         bins_before=bins_before, out_channels=out_channels,
                         kernels=kernels)

    fwd = jax.jit(functools.partial(
        stone_forward, n_bins=n_bins, bins_before=bins_before,
        n_harmonics=n_harmonics, frame_len=frame_len, temperature=temperature))

    y, difference, mean_hcqt = fwd(params, audio, k_rand)
    jax.block_until_ready((y, difference, mean_hcqt))

    assert y.shape == (3 * B, 12)
    assert difference.shape == (B,)
    assert mean_hcqt.shape == (B, n_harmonics, 12)
    assert bool(jnp.all(jnp.isfinite(y)))
    assert bool(jnp.allclose(jnp.sum(y, axis=-1), 1.0, atol=1e-3))
    print("KERNEL_OK")
</pallas_src>

<mosaic_0001>
module attributes {stable_mosaic.version = 11 : i64} {
  func.func @_hcqt_kernel_single(%arg0: i32, %arg1: memref<16x256xf32, #tpu.memory_space<vmem>>, %arg2: memref<256x256xbf16, #tpu.memory_space<vmem>>, %arg3: memref<16x256xf32, #tpu.memory_space<vmem>>) attributes {dimension_semantics = [#tpu.dimension_semantics<parallel>], iteration_bounds = array<i64: 2>, scalar_prefetch = 0 : i64, scratch_operands = 0 : i64, tpu.core_type = #tpu.core_type<tc>, window_params = [{transform_indices = @transform_0, window_bounds = array<i64: 16, 256>}, {pipeline_mode = #tpu.pipeline_mode<synchronous>, transform_indices = @transform_1, window_bounds = array<i64: 256, 256>}, {transform_indices = @transform_2, window_bounds = array<i64: 16, 256>}]} {
    %c0 = arith.constant 0 : index
    %c0_0 = arith.constant 0 : index
    %0 = vector.load %arg1[%c0, %c0_0] : memref<16x256xf32, #tpu.memory_space<vmem>>, vector<16x256xf32>
    %1 = arith.truncf %0 : vector<16x256xf32> to vector<16x256xbf16>
    %c0_1 = arith.constant 0 : index
    %c0_2 = arith.constant 0 : index
    %2 = vector.load %arg2[%c0_1, %c0_2] : memref<256x256xbf16, #tpu.memory_space<vmem>>, vector<256x256xbf16>
    %cst = arith.constant dense<0.000000e+00> : vector<16x256xf32>
    %3 = tpu.matmul %1, %2, %cst {dimension_numbers = #tpu.dot_dimension_numbers<[1], [0], [0], [1], [0, 0, 1, 1], [], []>} : vector<16x256xbf16>, vector<256x256xbf16>, vector<16x256xf32> -> vector<16x256xf32>
    %4 = math.absf %3 : vector<16x256xf32>
    %c0_3 = arith.constant 0 : index
    %c0_4 = arith.constant 0 : index
    %5 = vector.load %arg3[%c0_3, %c0_4] : memref<16x256xf32, #tpu.memory_space<vmem>>, vector<16x256xf32>
    tpu.vector_store %arg3[%c0_3, %c0_4], %4 {strides = array<i32>} : memref<16x256xf32, #tpu.memory_space<vmem>>, vector<16x256xf32>,
    return
  }
  func.func @transform_0(%arg0: i32) -> (i32, i32) {
    %c0_i32 = arith.constant 0 : i32
    %c0_i32_0 = arith.constant 0 : i32
    return %arg0, %c0_i32 : i32, i32
  }
  func.func @transform_1(%arg0: i32) -> (i32, i32) {
    %c0_i32 = arith.constant 0 : i32
    %c0_i32_0 = arith.constant 0 : i32
    %c0_i32_1 = arith.constant 0 : i32
    return %c0_i32, %c0_i32_0 : i32, i32
  }
  func.func @transform_2(%arg0: i32) -> (i32, i32) {
    %c0_i32 = arith.constant 0 : i32
    %c0_i32_0 = arith.constant 0 : i32
    return %arg0, %c0_i32 : i32, i32
  }
}

module attributes {stable_mosaic.version = 11 : i64} {
  func.func @_chromanet_kernel(%arg0: i32, %arg1: memref<6xi32, #tpu.memory_space<smem>>, %arg2: memref<6xi32, #tpu.memory_space<smem>>, %arg3: memref<8x256xf32, #tpu.memory_space<vmem>>, %arg4: memref<3x64x16xf32, #tpu.memory_space<vmem>>, %arg5: memref<3x128x64xf32, #tpu.memory_space<vmem>>, %arg6: memref<12x128xf32, #tpu.memory_space<vmem>>, %arg7: memref<2x16xf32, #tpu.memory_space<vmem>>, %arg8: memref<84x12xf32, #tpu.memory_space<vmem>>, %arg9: memref<1x12x1xf32, #tpu.memory_space<vmem>>, %arg10: memref<1x2x12xf32, #tpu.memory_space<vmem>>) attributes {dimension_semantics = [#tpu.dimension_semantics<parallel>], iteration_bounds = array<i64: 6>, scalar_prefetch = 2 : i64, scratch_operands = 0 : i64, tpu.core_type = #tpu.core_type<tc>, window_params = [{transform_indices = @transform_0, window_bounds = array<i64: 8, 256>}, {pipeline_mode = #tpu.pipeline_mode<synchronous>, transform_indices = @transform_1, window_bounds = array<i64: 3, 64, 16>}, {pipeline_mode = #tpu.pipeline_mode<synchronous>, transform_indices = @transform_2, window_bounds = array<i64: 3, 128, 64>}, {pipeline_mode = #tpu.pipeline_mode<synchronous>, transform_indices = @transform_3, window_bounds = array<i64: 12, 128>}, {pipeline_mode = #tpu.pipeline_mode<synchronous>, transform_indices = @transform_4, window_bounds = array<i64: 2, 16>}, {pipeline_mode = #tpu.pipeline_mode<synchronous>, transform_indices = @transform_5, window_bounds = array<i64: 84, 12>}, {transform_indices = @transform_6, window_bounds = array<i64: 1, 12, 1>}, {transform_indices = @transform_7, window_bounds = array<i64: 1, 2, 12>}]} {
    %0 = arith.index_cast %arg0 : i32 to index
    %1 = memref.load %arg2[%0] : memref<6xi32, #tpu.memory_space<smem>>
    %c0 = arith.constant 0 : index
    %c0_0 = arith.constant 0 : index
    %2 = vector.load %arg3[%c0, %c0_0] : memref<8x256xf32, #tpu.memory_space<vmem>>, vector<8x256xf32>
    %3 = vector.extract_strided_slice %2 {offsets = [0, 0], sizes = [8, 128], strides = [1, 1]} : vector<8x256xf32> to vector<8x128xf32>
    %4 = vector.extract_strided_slice %2 {offsets = [0, 128], sizes = [8, 128], strides = [1, 1]} : vector<8x256xf32> to vector<8x128xf32>
    %5 = tpu.concatenate %3, %4 in 0 : vector<8x128xf32>, vector<8x128xf32> -> vector<16x128xf32>
    %6 = tpu.iota {dimensions = array<i32: 0>} : vector<128x84xi32>
    %7 = tpu.iota {dimensions = array<i32: 1>} : vector<128x84xi32>
    %8 = vector.broadcast %1 : i32 to vector<128x84xi32>
    %9 = arith.addi %7, %8 : vector<128x84xi32>
    %10 = arith.cmpi eq, %6, %9 : vector<128x84xi32>
    %11 = arith.extui %10 : vector<128x84xi1> to vector<128x84xi32>
    %12 = arith.sitofp %11 : vector<128x84xi32> to vector<128x84xf32>
    %cst = arith.constant dense<0.000000e+00> : vector<16x84xf32>
    %13 = tpu.matmul %5, %12, %cst {dimension_numbers = #tpu.dot_dimension_numbers<[1], [0], [0], [1], [0, 0, 1, 1], [], []>} : vector<16x128xf32>, vector<128x84xf32>, vector<16x84xf32> -> vector<16x84xf32>
    %c0_1 = arith.constant 0 : index
    %c0_2 = arith.constant 0 : index
    %14 = vector.load %arg7[%c0_1, %c0_2] : memref<2x16xf32, #tpu.memory_space<vmem>>, vector<2x16xf32>
    %cst_3 = arith.constant dense<0.000000e+00> : vector<2x84xf32>
    %15 = tpu.matmul %14, %13, %cst_3 {dimension_numbers = #tpu.dot_dimension_numbers<[1], [0], [0], [1], [0, 0, 1, 1], [], []>} : vector<2x16xf32>, vector<16x84xf32>, vector<2x84xf32> -> vector<2x84xf32>
    %c0_4 = arith.constant 0 : index
    %c0_5 = arith.constant 0 : index
    %16 = vector.load %arg8[%c0_4, %c0_5] : memref<84x12xf32, #tpu.memory_space<vmem>>, vector<84x12xf32>
    %cst_6 = arith.constant dense<0.000000e+00> : vector<2x12xf32>
    %17 = tpu.matmul %15, %16, %cst_6 {dimension_numbers = #tpu.dot_dimension_numbers<[1], [0], [0], [1], [0, 0, 1, 1], [], []>} : vector<2x84xf32>, vector<84x12xf32>, vector<2x12xf32> -> vector<2x12xf32>
    %c0_7 = arith.constant 0 : index
    %c0_8 = arith.constant 0 : index
    %c0_9 = arith.constant 0 : index
    %18 = vector.load %arg10[%c0_7, %c0_8, %c0_9] : memref<1x2x12xf32, #tpu.memory_space<vmem>>, vector<1x2x12xf32>
    %19 = vector.shape_cast %18 : vector<1x2x12xf32> to vector<2x12xf32>
    %20 = vector.shape_cast %17 : vector<2x12xf32> to vector<1x2x12xf32>
    tpu.vector_store %arg10[%c0_7, %c0_8, %c0_9], %20 {strides = array<i32>} : memref<1x2x12xf32, #tpu.memory_space<vmem>>, vector<1x2x12xf32>,
    %c1 = arith.constant 1 : index
    %c0_10 = arith.constant 0 : index
    %c0_11 = arith.constant 0 : index
    %21 = vector.load %arg4[%c1, %c0_10, %c0_11] : memref<3x64x16xf32, #tpu.memory_space<vmem>>, vector<1x64x16xf32>
    %22 = vector.shape_cast %21 : vector<1x64x16xf32> to vector<64x16xf32>
    %cst_12 = arith.constant dense<0.000000e+00> : vector<64x84xf32>
    %23 = tpu.matmul %22, %13, %cst_12 {dimension_numbers = #tpu.dot_dimension_numbers<[1], [0], [0], [1], [0, 0, 1, 1], [], []>} : vector<64x16xf32>, vector<16x84xf32>, vector<64x84xf32> -> vector<64x84xf32>
    %c0_13 = arith.constant 0 : index
    %c0_14 = arith.constant 0 : index
    %c0_15 = arith.constant 0 : index
    %24 = vector.load %arg4[%c0_13, %c0_14, %c0_15] : memref<3x64x16xf32, #tpu.memory_space<vmem>>, vector<1x64x16xf32>
    %25 = vector.shape_cast %24 : vector<1x64x16xf32> to vector<64x16xf32>
    %cst_16 = arith.constant 0.000000e+00 : f32
    %26 = vector.broadcast %cst_16 : f32 to vector<16x1xf32>
    %27 = tpu.concatenate %26, %13, %26 in 1 : vector<16x1xf32>, vector<16x84xf32>, vector<16x1xf32> -> vector<16x86xf32>
    %28 = vector.extract_strided_slice %27 {offsets = [0, 0], sizes = [16, 84], strides = [1, 1]} : vector<16x86xf32> to vector<16x84xf32>
    %cst_17 = arith.constant dense<0.000000e+00> : vector<64x84xf32>
    %29 = tpu.matmul %25, %28, %cst_17 {dimension_numbers = #tpu.dot_dimension_numbers<[1], [0], [0], [1], [0, 0, 1, 1], [], []>} : vector<64x16xf32>, vector<16x84xf32>, vector<64x84xf32> -> vector<64x84xf32>
    %30 = arith.addf %23, %29 : vector<64x84xf32>
    %c2 = arith.constant 2 : index
    %c0_18 = arith.constant 0 : index
    %c0_19 = arith.constant 0 : index
    %31 = vector.load %arg4[%c2, %c0_18, %c0_19] : memref<3x64x16xf32, #tpu.memory_space<vmem>>, vector<1x64x16xf32>
    %32 = vector.shape_cast %31 : vector<1x64x16xf32> to vector<64x16xf32>
    %cst_20 = arith.constant 0.000000e+00 : f32
    %33 = vector.broadcast %cst_20 : f32 to vector<16x1xf32>
    %34 = tpu.concatenate %33, %13, %33 in 1 : vector<16x1xf32>, vector<16x84xf32>, vector<16x1xf32> -> vector<16x86xf32>
    %35 = vector.extract_strided_slice %34 {offsets = [0, 2], sizes = [16, 84], strides = [1, 1]} : vector<16x86xf32> to vector<16x84xf32>
    %cst_21 = arith.constant dense<0.000000e+00> : vector<64x84xf32>
    %36 = tpu.matmul %32, %35, %cst_21 {dimension_numbers = #tpu.dot_dimension_numbers<[1], [0], [0], [1], [0, 0, 1, 1], [], []>} : vector<64x16xf32>, vector<16x84xf32>, vector<64x84xf32> -> vector<64x84xf32>
    %37 = arith.addf %30, %36 : vector<64x84xf32>
    %cst_22 = arith.constant 0.000000e+00 : f32
    %38 = vector.broadcast %cst_22 : f32 to vector<64x84xf32>
    %39 = arith.maximumf %37, %38 : vector<64x84xf32>
    %c1_23 = arith.constant 1 : index
    %c0_24 = arith.constant 0 : index
    %c0_25 = arith.constant 0 : index
    %40 = vector.load %arg5[%c1_23, %c0_24, %c0_25] : memref<3x128x64xf32, #tpu.memory_space<vmem>>, vector<1x128x64xf32>
    %41 = vector.shape_cast %40 : vector<1x128x64xf32> to vector<128x64xf32>
    %cst_26 = arith.constant dense<0.000000e+00> : vector<128x84xf32>
    %42 = tpu.matmul %41, %39, %cst_26 {dimension_numbers = #tpu.dot_dimension_numbers<[1], [0], [0], [1], [0, 0, 1, 1], [], []>} : vector<128x64xf32>, vector<64x84xf32>, vector<128x84xf32> -> vector<128x84xf32>
    %c0_27 = arith.constant 0 : index
    %c0_28 = arith.constant 0 : index
    %c0_29 = arith.constant 0 : index
    %43 = vector.load %arg5[%c0_27, %c0_28, %c0_29] : memref<3x128x64xf32, #tpu.memory_space<vmem>>, vector<1x128x64xf32>
    %44 = vector.shape_cast %43 : vector<1x128x64xf32> to vector<128x64xf32>
    %cst_30 = arith.constant 0.000000e+00 : f32
    %45 = vector.broadcast %cst_30 : f32 to vector<64x1xf32>
    %46 = tpu.concatenate %45, %39, %45 in 1 : vector<64x1xf32>, vector<64x84xf32>, vector<64x1xf32> -> vector<64x86xf32>
    %47 = vector.extract_strided_slice %46 {offsets = [0, 0], sizes = [64, 84], strides = [1, 1]} : vector<64x86xf32> to vector<64x84xf32>
    %cst_31 = arith.constant dense<0.000000e+00> : vector<128x84xf32>
    %48 = tpu.matmul %44, %47, %cst_31 {dimension_numbers = #tpu.dot_dimension_numbers<[1], [0], [0], [1], [0, 0, 1, 1], [], []>} : vector<128x64xf32>, vector<64x84xf32>, vector<128x84xf32> -> vector<128x84xf32>
    %49 = arith.addf %42, %48 : vector<128x84xf32>
    %c2_32 = arith.constant 2 : index
    %c0_33 = arith.constant 0 : index
    %c0_34 = arith.constant 0 : index
    %50 = vector.load %arg5[%c2_32, %c0_33, %c0_34] : memref<3x128x64xf32, #tpu.memory_space<vmem>>, vector<1x128x64xf32>
    %51 = vector.shape_cast %50 : vector<1x128x64xf32> to vector<128x64xf32>
    %cst_35 = arith.constant 0.000000e+00 : f32
    %52 = vector.broadcast %cst_35 : f32 to vector<64x1xf32>
    %53 = tpu.concatenate %52, %39, %52 in 1 : vector<64x1xf32>, vector<64x84xf32>, vector<64x1xf32> -> vector<64x86xf32>
    %54 = vector.extract_strided_slice %53 {offsets = [0, 2], sizes = [64, 84], strides = [1, 1]} : vector<64x86xf32> to vector<64x84xf32>
    %cst_36 = arith.constant dense<0.000000e+00> : vector<128x84xf32>
    %55 = tpu.matmul %51, %54, %cst_36 {dimension_numbers = #tpu.dot_dimension_numbers<[1], [0], [0], [1], [0, 0, 1, 1], [], []>} : vector<128x64xf32>, vector<64x84xf32>, vector<128x84xf32> -> vector<128x84xf32>
    %56 = arith.addf %49, %55 : vector<128x84xf32>
    %cst_37 = arith.constant 0.000000e+00 : f32
    %57 = vector.broadcast %cst_37 : f32 to vector<128x84xf32>
    %58 = arith.maximumf %56, %57 : vector<128x84xf32>
    %cst_38 = arith.constant dense<0.000000e+00> : vector<128xf32>
    %59 = vector.multi_reduction <add>, %58, %cst_38 [1] : vector<128x84xf32> to vector<128xf32>
    %60 = vector.shape_cast %59 : vector<128xf32> to vector<128x1xf32>
    %c0_39 = arith.constant 0 : index
    %c0_40 = arith.constant 0 : index
    %61 = vector.load %arg6[%c0_39, %c0_40] : memref<12x128xf32, #tpu.memory_space<vmem>>, vector<12x128xf32>
    %cst_41 = arith.constant dense<0.000000e+00> : vector<12x1xf32>
    %62 = tpu.matmul %61, %60, %cst_41 {dimension_numbers = #tpu.dot_dimension_numbers<[1], [0], [0], [1], [0, 0, 1, 1], [], []>} : vector<12x128xf32>, vector<128x1xf32>, vector<12x1xf32> -> vector<12x1xf32>
    %cst_42 = arith.constant 1.000000e+01 : f32
    %63 = vector.broadcast %cst_42 : f32 to vector<12x1xf32>
    %64 = arith.mulf %62, %63 : vector<12x1xf32>
    %cst_43 = arith.constant dense<0xFF800000> : vector<1xf32>
    %65 = vector.multi_reduction <maximumf>, %64, %cst_43 [0] : vector<12x1xf32> to vector<1xf32>
    %66 = vector.shape_cast %65 : vector<1xf32> to vector<1x1xf32>
    %67 = vector.broadcast %66 : vector<1x1xf32> to vector<12x1xf32>
    %68 = arith.subf %64, %67 : vector<12x1xf32>
    %69 = math.exp %68 : vector<12x1xf32>
    %cst_44 = arith.constant dense<0.000000e+00> : vector<1xf32>
    %70 = vector.multi_reduction <add>, %69, %cst_44 [0] : vector<12x1xf32> to vector<1xf32>
    %71 = vector.shape_cast %70 : vector<1xf32> to vector<1x1xf32>
    %72 = vector.broadcast %71 : vector<1x1xf32> to vector<12x1xf32>
    %73 = arith.divf %69, %72 : vector<12x1xf32>
    %c0_45 = arith.constant 0 : index
    %c0_46 = arith.constant 0 : index
    %c0_47 = arith.constant 0 : index
    %74 = vector.load %arg9[%c0_45, %c0_46, %c0_47] : memref<1x12x1xf32, #tpu.memory_space<vmem>>, vector<1x12x1xf32>
    %75 = vector.shape_cast %74 : vector<1x12x1xf32> to vector<12x1xf32>
    %76 = vector.shape_cast %73 : vector<12x1xf32> to vector<1x12x1xf32>
    tpu.vector_store %arg9[%c0_45, %c0_46, %c0_47], %76 {strides = array<i32>} : memref<1x12x1xf32, #tpu.memory_space<vmem>>, vector<1x12x1xf32>,
    return
  }
  func.func @transform_0(%arg0: i32, %arg1: memref<6xi32, #tpu.memory_space<smem>>, %arg2: memref<6xi32, #tpu.memory_space<smem>>) -> (i32, i32) {
    %0 = arith.index_cast %arg0 : i32 to index
    %1 = memref.load %arg1[%0] : memref<6xi32, #tpu.memory_space<smem>>
    %c0_i32 = arith.constant 0 : i32
    %c0_i32_0 = arith.constant 0 : i32
    return %1, %c0_i32 : i32, i32
  }
  func.func @transform_1(%arg0: i32, %arg1: memref<6xi32, #tpu.memory_space<smem>>, %arg2: memref<6xi32, #tpu.memory_space<smem>>) -> (i32, i32, i32) {
    %c0_i32 = arith.constant 0 : i32
    %c0_i32_0 = arith.constant 0 : i32
    %c0_i32_1 = arith.constant 0 : i32
    %c0_i32_2 = arith.constant 0 : i32
    return %c0_i32, %c0_i32_0, %c0_i32_1 : i32, i32, i32
  }
  func.func @transform_2(%arg0: i32, %arg1: memref<6xi32, #tpu.memory_space<smem>>, %arg2: memref<6xi32, #tpu.memory_space<smem>>) -> (i32, i32, i32) {
    %c0_i32 = arith.constant 0 : i32
    %c0_i32_0 = arith.constant 0 : i32
    %c0_i32_1 = arith.constant 0 : i32
    %c0_i32_2 = arith.constant 0 : i32
    return %c0_i32, %c0_i32_0, %c0_i32_1 : i32, i32, i32
  }
  func.func @transform_3(%arg0: i32, %arg1: memref<6xi32, #tpu.memory_space<smem>>, %arg2: memref<6xi32, #tpu.memory_space<smem>>) -> (i32, i32) {
    %c0_i32 = arith.constant 0 : i32
    %c0_i32_0 = arith.constant 0 : i32
    %c0_i32_1 = arith.constant 0 : i32
    return %c0_i32, %c0_i32_0 : i32, i32
  }
  func.func @transform_4(%arg0: i32, %arg1: memref<6xi32, #tpu.memory_space<smem>>, %arg2: memref<6xi32, #tpu.memory_space<smem>>) -> (i32, i32) {
    %c0_i32 = arith.constant 0 : i32
    %c0_i32_0 = arith.constant 0 : i32
    %c0_i32_1 = arith.constant 0 : i32
    return %c0_i32, %c0_i32_0 : i32, i32
  }
  func.func @transform_5(%arg0: i32, %arg1: memref<6xi32, #tpu.memory_space<smem>>, %arg2: memref<6xi32, #tpu.memory_space<smem>>) -> (i32, i32) {
    %c0_i32 = arith.constant 0 : i32
    %c0_i32_0 = arith.constant 0 : i32
    %c0_i32_1 = arith.constant 0 : i32
    return %c0_i32, %c0_i32_0 : i32, i32
  }
  func.func @transform_6(%arg0: i32, %arg1: memref<6xi32, #tpu.memory_space<smem>>, %arg2: memref<6xi32, #tpu.memory_space<smem>>) -> (i32, i32, i32) {
    %c0_i32 = arith.constant 0 : i32
    %c0_i32_0 = arith.constant 0 : i32
    %c0_i32_1 = arith.constant 0 : i32
    return %arg0, %c0_i32, %c0_i32_0 : i32, i32, i32
  }
  func.func @transform_7(%arg0: i32, %arg1: memref<6xi32, #tpu.memory_space<smem>>, %arg2: memref<6xi32, #tpu.memory_space<smem>>) -> (i32, i32, i32) {
    %c0_i32 = arith.constant 0 : i32
    %c0_i32_0 = arith.constant 0 : i32
    %c0_i32_1 = arith.constant 0 : i32
    return %arg0, %c0_i32, %c0_i32_0 : i32, i32, i32
  }
}

</mosaic_0001>

<llo_original>
// kernel: stone_forward.40
$region0: #{stone_forward.40}
  #allocation0 [shape = 'u32[]', space=smem, size = 0x4, offset = 0x4, fixed_abs, tag = 'smem constant byte address 0x4 - core index']
  #allocation1 [shape = 'u32[144,128]{1,0:T(1,128)}', space=vmem, size = 0x12000, scoped, tag = 'internal scratch']
  %s0 = inlined_call_operand.vmem [shape: f32[32,256], index: 0, kind: input, shape index: {}]
  %s1 = inlined_call_operand.vmem [shape: bf16[256,256], index: 1, kind: input, shape index: {}]
  %s2 = inlined_call_operand.vmem [shape: f32[32,256], index: 2, kind: output, shape index: {}]
  %s3 = sld [smem:[#allocation0]]
  $region41: #{stone_forward.40} parent=0
    _
  %s5 = ssub.s32 1, %s3
  %s6 = scalar_select 0, %s5, %s3
  loop: start=0, step=1, limit=4
  $region2: #{stone_forward.40} parent=0 // loop_pre_header
    _
  $region3: #{stone_forward.40} parent=0 // loop_header
    %s8 = sphi 0, %s12
    %p9 = scmp.ge.s32.totalorder %s8, 4
    %s18 = sphi 0, %s20
    %s21 = sphi 0, %s18
    %s22 = sphi 0, %s21
    %s38 = sphi 0, %s22
    %s42 = sphi 0, %s42
    %s44 = sphi 0, %s42
    %s45 = sphi 0, %s44
    %s59 = sphi 0, %s45
    %s65 = sphi 0, %s67
    %s68 = sphi 0, %s65
    %s69 = sphi 0, %s68
    %s85 = sphi 0, %s69
  $region4: #{stone_forward.40} parent=0 // loop_header_branch
    %11 = sbr.rel (%p9) target = $region8
  $region5: #{stone_forward.40} parent=0 // loop_body
    %s13 = ssub.s32 %s8, 1
    %s14 = ssub.s32 %s8, 2
    %s15 = sadd.s32 %s8, 1
    %s16 = ssub.s32 %s8, %s15
    %p17 = scmp.eq.s32.totalorder %s16, 0
    %s19 = sadd.s32 %s18, 1
    %s20 = scalar_select %p17, %s18, %s19
    %p23 = pneg %p17
    %p24 = scmp.eq.s32.totalorder %s8, 1
    %p25 = por %p23, %p24
    %p26 = scmp.ne.s32.totalorder %s18, %s21
    %p27 = scmp.eq.s32.totalorder %s8, 0
    %p28 = por %p26, %p27
    %p29 = scmp.ne.s32.totalorder %s18, %s21
    %p30 = scmp.eq.s32.totalorder %s13, 1
    %p31 = por %p29, %p30
    %p32 = scmp.ne.s32.totalorder %s21, %s22
    %p33 = scmp.eq.s32.totalorder %s13, 0
    %p34 = por %p32, %p33
    %p35 = scmp.ne.s32.totalorder %s21, %s22
    %p36 = scmp.eq.s32.totalorder %s14, 1
    %p37 = por %p35, %p36
    %p39 = scmp.ne.s32.totalorder %s22, %s38
    %p40 = scmp.eq.s32.totalorder %s14, 0
    %p41 = por %p39, %p40
    %s43 = sadd.s32 %s42, 1
    %p46 = scmp.eq.s32.totalorder %s8, 1
    %p47 = scmp.ne.s32.totalorder %s42, %s44
    %p48 = scmp.eq.s32.totalorder %s8, 0
    %p49 = por %p47, %p48
    %p50 = scmp.ne.s32.totalorder %s42, %s44
    %p51 = scmp.eq.s32.totalorder %s13, 1
    %p52 = por %p50, %p51
    %p53 = scmp.ne.s32.totalorder %s44, %s45
    %p54 = scmp.eq.s32.totalorder %s13, 0
    %p55 = por %p53, %p54
    %p56 = scmp.ne.s32.totalorder %s44, %s45
    %p57 = scmp.eq.s32.totalorder %s14, 1
    %p58 = por %p56, %p57
    %p60 = scmp.ne.s32.totalorder %s45, %s59
    %p61 = scmp.eq.s32.totalorder %s14, 0
    %p62 = por %p60, %p61
    %s63 = ssub.s32 %s8, %s15
    %p64 = scmp.eq.s32.totalorder %s63, 0
    %s66 = sadd.s32 %s65, 1
    %s67 = scalar_select %p64, %s65, %s66
    %p70 = pneg %p64
    %p71 = scmp.eq.s32.totalorder %s8, 1
    %p72 = por %p70, %p71
    %p73 = scmp.ne.s32.totalorder %s65, %s68
    %p74 = scmp.eq.s32.totalorder %s8, 0
    %p75 = por %p73, %p74
    %p76 = scmp.ne.s32.totalorder %s65, %s68
    %p77 = scmp.eq.s32.totalorder %s13, 1
    %p78 = por %p76, %p77
    %p79 = scmp.ne.s32.totalorder %s68, %s69
    %p80 = scmp.eq.s32.totalorder %s13, 0
    %p81 = por %p79, %p80
    %p82 = scmp.ne.s32.totalorder %s68, %s69
    %p83 = scmp.eq.s32.totalorder %s14, 1
    %p84 = por %p82, %p83
    %p86 = scmp.ne.s32.totalorder %s69, %s85
    %p87 = scmp.eq.s32.totalorder %s14, 0
    %p88 = por %p86, %p87
    %p89 = scmp.le.s32.totalorder 1, %s8
    %p90 = scmp.lt.s32.totalorder %s8, 3
    %p91 = pnand %p89, %p90
    %p92 = pneg %p91
    // Predicated region
    $region9: #{stone_forward.40} parent=5 // pred_check
      _
    $region10: #{stone_forward.40} parent=5 // pred_check_branch
      %94 = sbr.rel (%p91) target = $region12
    $region11: #{stone_forward.40} parent=5 // pred_region
      %s95 = ssub.s32 %s8, 1
      // Predicated region
      $region13: #{stone_forward.40} parent=11 // pred_check
        %p96 = pneg %p55
      $region14: #{stone_forward.40} parent=11 // pred_check_branch
        %98 = sbr.rel (%p96) target = $region16
      $region15: #{stone_forward.40} parent=11 // pred_region
        _
      $region16: #{stone_forward.40} parent=11 // pred_fallthru
        _
    $region12: #{stone_forward.40} parent=5 // pred_fallthru
      _
    %p99 = scmp.lt.s32.totalorder %s8, 2
    // Predicated region
    $region17: #{stone_forward.40} parent=5 // pred_check
      %p100 = pneg %p99
    $region18: #{stone_forward.40} parent=5 // pred_check_branch
      %102 = sbr.rel (%p100) target = $region20
    $region19: #{stone_forward.40} parent=5 // pred_region
      // Predicated region
      $region21: #{stone_forward.40} parent=19 // pred_check
        %p103 = pneg %p28
      $region22: #{stone_forward.40} parent=19 // pred_check_branch
        %105 = sbr.rel (%p103) target = $region24
      $region23: #{stone_forward.40} parent=19 // pred_region
        %s106 = smul.u32 2, %s8
        %p107 = scmp.lt.s32.totalorder %s106, 3
        %s108 = scalar_select %p107, %s106, 3
        %s109 = smul.addr %s108, 2
        %s110 = smul.addr %s109, 8
        %s111 = scalar_lea.vmem %s0, %s110
        %s112 = smul.u32 2, %s8
      $region24: #{stone_forward.40} parent=19 // pred_fallthru
        _
    $region20: #{stone_forward.40} parent=5 // pred_fallthru
      _
    %p113 = scmp.le.s32.totalorder 1, %s8
    %p114 = scmp.lt.s32.totalorder %s8, 3
    %p115 = pnand %p113, %p114
    %p116 = pneg %p115
    // Predicated region
    $region25: #{stone_forward.40} parent=5 // pred_check
      _
    $region26: #{stone_forward.40} parent=5 // pred_check_branch
      %118 = sbr.rel (%p115) target = $region28
    $region27: #{stone_forward.40} parent=5 // pred_region
      %s119 = ssub.s32 %s8, 1
      %s120 = smul.u32 2, %s13
      %p121 = scmp.lt.s32.totalorder %s120, 3
      %s122 = scalar_select %p121, %s120, 3
      %s123 = smul.addr %s122, 2
      %s124 = smul.addr %s123, 8
      %s125 = scalar_lea.vmem %s0, %s124
      %p126 = pneg %p34
      %p127 = pneg %p31
      %p128 = pneg %p55
      %p129 = pneg %p52
      %p130 = pneg %p81
      %p131 = pneg %p78
      %s132 = smul.u32 2, %s13
      %p133 = scmp.lt.s32.totalorder %s132, 3
      %s134 = scalar_select %p133, %s132, 3
      %s135 = smul.addr %s134, 2
      %s136 = smul.addr %s135, 8
      %s137 = scalar_lea.vmem %s2, %s136
      %s138 = smul.u32 2, %s13
      %p139 = scmp.lt.s32.totalorder %s138, 3
      %s140 = scalar_select %p139, %s138, 3
      %s141 = smul.addr %s140, 2
      %s142 = smul.addr %s141, 8
      %s143 = scalar_lea.vmem %s0, %s142
      %s144 = smul.u32 2, %s13
      %s145 = smul.u32 2, %s13
      %p146 = scmp.lt.s32.totalorder %s145, 3
      %s147 = scalar_select %p146, %s145, 3
      %s148 = smul.addr %s147, 2
      %s149 = smul.addr %s148, 8
      %s150 = scalar_lea.vmem %s2, %s149
      %s151 = smul.u32 2, %s13
      %v152 = vld [vmem:[%s143] sm:$0xff]
      %v153 = vld [vmem:[%s143 + $0x8] sm:$0xff]
      %v154 = vld [vmem:[%s143 + $0x10] sm:$0xff]
      %v155 = vld [vmem:[%s143 + $0x18] sm:$0xff]
      %v156 = vpack.c.bf16 %v154, %v152
      %v157 = vpack.c.bf16 %v155, %v153
      %v158 = vld [vmem:[%s1] sm:$0xff]
      %v159 = vld [vmem:[%s1 + $0x8] sm:$0xff]
      %v160 = vld [vmem:[%s1 + $0x10] sm:$0xff]
      %v161 = vld [vmem:[%s1 + $0x18] sm:$0xff]
      %v162 = vld [vmem:[%s1 + $0x20] sm:$0xff]
      %v163 = vld [vmem:[%s1 + $0x28] sm:$0xff]
      %v164 = vld [vmem:[%s1 + $0x30] sm:$0xff]
      %v165 = vld [vmem:[%s1 + $0x38] sm:$0xff]
      %v166 = vld [vmem:[%s1 + $0x40] sm:$0xff]
      %v167 = vld [vmem:[%s1 + $0x48] sm:$0xff]
      %v168 = vld [vmem:[%s1 + $0x50] sm:$0xff]
      %v169 = vld [vmem:[%s1 + $0x58] sm:$0xff]
      %v170 = vld [vmem:[%s1 + $0x60] sm:$0xff]
      %v171 = vld [vmem:[%s1 + $0x68] sm:$0xff]
      %v172 = vld [vmem:[%s1 + $0x70] sm:$0xff]
      %v173 = vld [vmem:[%s1 + $0x78] sm:$0xff]
      %v174 = vld [vmem:[%s1 + $0x80] sm:$0xff]
      %v175 = vld [vmem:[%s1 + $0x88] sm:$0xff]
      %v176 = vld [vmem:[%s1 + $0x90] sm:$0xff]
      %v177 = vld [vmem:[%s1 + $0x98] sm:$0xff]
      %v178 = vld [vmem:[%s1 + $0xa0] sm:$0xff]
      %v179 = vld [vmem:[%s1 + $0xa8] sm:$0xff]
      %v180 = vld [vmem:[%s1 + $0xb0] sm:$0xff]
      %v181 = vld [vmem:[%s1 + $0xb8] sm:$0xff]
      %v182 = vld [vmem:[%s1 + $0xc0] sm:$0xff]
      %v183 = vld [vmem:[%s1 + $0xc8] sm:$0xff]
      %v184 = vld [vmem:[%s1 + $0xd0] sm:$0xff]
      %v185 = vld [vmem:[%s1 + $0xd8] sm:$0xff]
      %v186 = vld [vmem:[%s1 + $0xe0] sm:$0xff]
      %v187 = vld [vmem:[%s1 + $0xe8] sm:$0xff]
      %v188 = vld [vmem:[%s1 + $0xf0] sm:$0xff]
      %v189 = vld [vmem:[%s1 + $0xf8] sm:$0xff]
      %v222 = vunpack.c.l.b16 %v158
      %v223 = vunpack.c.h.b16 %v158
      %v224 = vunpack.c.l.b16 %v159
      %v225 = vunpack.c.h.b16 %v159
      %v226 = vunpack.c.l.b16 %v160
      %v227 = vunpack.c.h.b16 %v160
      %v228 = vunpack.c.l.b16 %v161
      %v229 = vunpack.c.h.b16 %v161
      %v230 = vunpack.c.l.b16 %v162
      %v231 = vunpack.c.h.b16 %v162
      %v232 = vunpack.c.l.b16 %v163
      %v233 = vunpack.c.h.b16 %v163
      %v234 = vunpack.c.l.b16 %v164
      %v235 = vunpack.c.h.b16 %v164
      %v236 = vunpack.c.l.b16 %v165
      %v237 = vunpack.c.h.b16 %v165
      %v238 = vunpack.c.l.b16 %v166
      %v239 = vunpack.c.h.b16 %v166
      %v240 = vunpack.c.l.b16 %v167
      %v241 = vunpack.c.h.b16 %v167
      %v242 = vunpack.c.l.b16 %v168
      %v243 = vunpack.c.h.b16 %v168
      %v244 = vunpack.c.l.b16 %v169
      %v245 = vunpack.c.h.b16 %v169
      %v246 = vunpack.c.l.b16 %v170
      %v247 = vunpack.c.h.b16 %v170
      %v248 = vunpack.c.l.b16 %v171
      %v249 = vunpack.c.h.b16 %v171
      %v250 = vunpack.c.l.b16 %v172
      %v251 = vunpack.c.h.b16 %v172
      %v252 = vunpack.c.l.b16 %v173
      %v253 = vunpack.c.h.b16 %v173
      %v254 = vunpack.c.l.b16 %v174
      %v255 = vunpack.c.h.b16 %v174
      %v256 = vunpack.c.l.b16 %v175
      %v257 = vunpack.c.h.b16 %v175
      %v258 = vunpack.c.l.b16 %v176
      %v259 = vunpack.c.h.b16 %v176
      %v260 = vunpack.c.l.b16 %v177
      %v261 = vunpack.c.h.b16 %v177
      %v262 = vunpack.c.l.b16 %v178
      %v263 = vunpack.c.h.b16 %v178
      %v264 = vunpack.c.l.b16 %v179
      %v265 = vunpack.c.h.b16 %v179
      %v266 = vunpack.c.l.b16 %v180
      %v267 = vunpack.c.h.b16 %v180
      %v268 = vunpack.c.l.b16 %v181
      %v269 = vunpack.c.h.b16 %v181
      %v270 = vunpack.c.l.b16 %v182
      %v271 = vunpack.c.h.b16 %v182
      %v272 = vunpack.c.l.b16 %v183
      %v273 = vunpack.c.h.b16 %v183
      %v274 = vunpack.c.l.b16 %v184
      %v275 = vunpack.c.h.b16 %v184
      %v276 = vunpack.c.l.b16 %v185
      %v277 = vunpack.c.h.b16 %v185
      %v278 = vunpack.c.l.b16 %v186
      %v279 = vunpack.c.h.b16 %v186
      %v280 = vunpack.c.l.b16 %v187
      %v281 = vunpack.c.h.b16 %v187
      %v282 = vunpack.c.l.b16 %v188
      %v283 = vunpack.c.h.b16 %v188
      %v284 = vunpack.c.l.b16 %v189
      %v285 = vunpack.c.h.b16 %v189
      %v286 = vpack.c.b16 %v224, %v222
      %v287 = vpack.c.b16 %v225, %v223
      %v288 = vpack.c.b16 %v228, %v226
      %v289 = vpack.c.b16 %v229, %v227
      %v290 = vpack.c.b16 %v232, %v230
      %v291 = vpack.c.b16 %v233, %v231
      %v292 = vpack.c.b16 %v236, %v234
      %v293 = vpack.c.b16 %v237, %v235
      %v294 = vpack.c.b16 %v240, %v238
      %v295 = vpack.c.b16 %v241, %v239
      %v296 = vpack.c.b16 %v244, %v242
      %v297 = vpack.c.b16 %v245, %v243
      %v298 = vpack.c.b16 %v248, %v246
      %v299 = vpack.c.b16 %v249, %v247
      %v300 = vpack.c.b16 %v252, %v250
      %v301 = vpack.c.b16 %v253, %v251
      %v302 = vpack.c.b16 %v256, %v254
      %v303 = vpack.c.b16 %v257, %v255
      %v304 = vpack.c.b16 %v260, %v258
      %v305 = vpack.c.b16 %v261, %v259
      %v306 = vpack.c.b16 %v264, %v262
      %v307 = vpack.c.b16 %v265, %v263
      %v308 = vpack.c.b16 %v268, %v266
      %v309 = vpack.c.b16 %v269, %v267
      %v310 = vpack.c.b16 %v272, %v270
      %v311 = vpack.c.b16 %v273, %v271
      %v312 = vpack.c.b16 %v276, %v274
      %v313 = vpack.c.b16 %v277, %v275
      %v314 = vpack.c.b16 %v280, %v278
      %v315 = vpack.c.b16 %v281, %v279
      %v316 = vpack.c.b16 %v284, %v282
      %v317 = vpack.c.b16 %v285, %v283
      %350 = vmatprep.subr.bf16.mxu0 %v287
      %351 = vmatpush1.bf16.msra.mxu0 %v286
      %352 = vmatprep.subr.bf16.mxu0 %v289
      %353 = vmatpush1.bf16.msra.mxu0 %v288
      %354 = vmatprep.subr.bf16.mxu0 %v291
      %355 = vmatpush1.bf16.msra.mxu0 %v290
      %356 = vmatprep.subr.bf16.mxu0 %v293
      %357 = vmatpush1.bf16.msra.mxu0 %v292
      %358 = vmatprep.subr.bf16.mxu0 %v295
      %359 = vmatpush1.bf16.msra.mxu0 %v294
      %360 = vmatprep.subr.bf16.mxu0 %v297
      %361 = vmatpush1.bf16.msra.mxu0 %v296
      %362 = vmatprep.subr.bf16.mxu0 %v299
      %363 = vmatpush1.bf16.msra.mxu0 %v298
      %364 = vmatprep.subr.bf16.mxu0 %v301
      %365 = vmatpush1.bf16.msra.mxu0 %v300
      %366 = vmatprep.subr.bf16.mxu0 %v303
      %367 = vmatpush1.bf16.msra.mxu0 %v302
      %368 = vmatprep.subr.bf16.mxu0 %v305
      %369 = vmatpush1.bf16.msra.mxu0 %v304
      %370 = vmatprep.subr.bf16.mxu0 %v307
      %371 = vmatpush1.bf16.msra.mxu0 %v306
      %372 = vmatprep.subr.bf16.mxu0 %v309
      %373 = vmatpush1.bf16.msra.mxu0 %v308
      %374 = vmatprep.subr.bf16.mxu0 %v311
      %375 = vmatpush1.bf16.msra.mxu0 %v310
      %376 = vmatprep.subr.bf16.mxu0 %v313
      %377 = vmatpush1.bf16.msra.mxu0 %v312
      %378 = vmatprep.subr.bf16.mxu0 %v315
      %379 = vmatpush1.bf16.msra.mxu0 %v314
      %380 = vmatprep.subr.bf16.mxu0 %v317
      %381 = vmatpush1.bf16.msra.mxu0 %v316
      %382 = vmatprep.mubr.bf16.mxu0 %v157
      %383 = vmatmul.mubr.bf16.gmra.mrb[0].mxu0 %v156
      %v384 = vpop.f32.mrb[0].mxu0
      %v385 = vadd.f32 0.0, %v384
      %v386 = vpop.f32.mrb[0].mxu0
      %v387 = vadd.f32 0.0, %v386
      %v388 = vpop.f32.mrb[0].mxu0
      %v389 = vadd.f32 0.0, %v388
      %v390 = vpop.f32.mrb[0].mxu0
      %v391 = vadd.f32 0.0, %v390
      %392 = vdwg.mxu0
      %v393 = vand.u32 2147483647, %v385
      %v394 = vand.u32 2147483647, %v387
      %v395 = vand.u32 2147483647, %v389
      %v396 = vand.u32 2147483647, %v391
      %397 = vst [vmem:[%s150] sm:$0xff] %v393
      %398 = vst [vmem:[%s150 + $0x8] sm:$0xff] %v394
      %399 = vst [vmem:[%s150 + $0x10] sm:$0xff] %v395
      %400 = vst [vmem:[%s150 + $0x18] sm:$0xff] %v396
      %s401 = smul.u32 2, %s13
      %p402 = scmp.lt.s32.totalorder %s401, 3
      %s403 = scalar_select %p402, %s401, 3
      %s404 = smul.addr %s403, 2
      %s405 = smul.addr %s404, 8
      %s406 = scalar_lea.vmem %s2, %s405
      // Predicated region
      $region29: #{stone_forward.40} parent=27 // pred_check
        %p407 = pneg %p78
      $region30: #{stone_forward.40} parent=27 // pred_check_branch
        %409 = sbr.rel (%p407) target = $region32
      $region31: #{stone_forward.40} parent=27 // pred_region
        %s410 = smul.u32 2, %s13
      $region32: #{stone_forward.40} parent=27 // pred_fallthru
        _
    $region28: #{stone_forward.40} parent=5 // pred_fallthru
      _
    %p411 = scmp.le.s32.totalorder 2, %s8
    // Predicated region
    $region33: #{stone_forward.40} parent=5 // pred_check
      %p412 = pneg %p411
    $region34: #{stone_forward.40} parent=5 // pred_check_branch
      %414 = sbr.rel (%p412) target = $region36
    $region35: #{stone_forward.40} parent=5 // pred_region
      %s415 = ssub.s32 %s8, 2
      // Predicated region
      $region37: #{stone_forward.40} parent=35 // pred_check
        %p416 = pneg %p84
      $region38: #{stone_forward.40} parent=35 // pred_check_branch
        %418 = sbr.rel (%p416) target = $region40
      $region39: #{stone_forward.40} parent=35 // pred_region
        %s419 = smul.u32 2, %s14
        %p420 = scmp.lt.s32.totalorder %s419, 3
        %s421 = scalar_select %p420, %s419, 3
        %s422 = smul.addr %s421, 2
        %s423 = smul.addr %s422, 8
        %s424 = scalar_lea.vmem %s2, %s423
      $region40: #{stone_forward.40} parent=35 // pred_fallthru
        _
    $region36: #{stone_forward.40} parent=5 // pred_fallthru
      _
  $region6: #{stone_forward.40} parent=0 // loop_footer
    %s12 = sadd.s32 1, %s8
  $region7: #{stone_forward.40} parent=0 // loop_footer_branch
    %7 = sbr.rel target = $region3
  $region8: #{stone_forward.40} parent=0 // loop_exit
    _

// kernel: stone_forward.41
$region0: #{stone_forward.41}
  #allocation0 [shape = 'u32[]', space=smem, size = 0x4, offset = 0x4, fixed_abs, tag = 'smem constant byte address 0x4 - core index']
  #allocation1 [shape = 'u32[144,128]{1,0:T(1,128)}', space=vmem, size = 0x12000, scoped, tag = 'internal scratch']
  #allocation2 [shape = 's32[1]{0}', space=sflag, size = 0x4, scoped, tag = 'scoped memory for stone_forward.41']
  #allocation3 [shape = 'u8[512]{0}', space=smem, size = 0x200, scoped, tag = 'prefetched SMEM operand 0']
  #allocation4 [shape = 'u8[512]{0}', space=smem, size = 0x200, scoped, tag = 'prefetched SMEM operand 1']
  %s0 = inlined_call_operand.vmem [shape: s32[6], index: 0, kind: input, shape index: {}]
  %s1 = inlined_call_operand.vmem [shape: s32[6], index: 1, kind: input, shape index: {}]
  %s2 = inlined_call_operand.vmem [shape: f32[32,256], index: 2, kind: input, shape index: {}]
  %s3 = inlined_call_operand.vmem [shape: f32[3,64,16], index: 3, kind: input, shape index: {}]
  %s4 = inlined_call_operand.vmem [shape: f32[3,128,64], index: 4, kind: input, shape index: {}]
  %s5 = inlined_call_operand.vmem [shape: f32[12,128], index: 5, kind: input, shape index: {}]
  %s6 = inlined_call_operand.vmem [shape: f32[2,16], index: 6, kind: input, shape index: {}]
  %s7 = inlined_call_operand.vmem [shape: f32[84,12], index: 7, kind: input, shape index: {}]
  %s8 = inlined_call_operand.vmem [shape: f32[6,12,1], index: 8, kind: output, shape index: {0}]
  %s9 = inlined_call_operand.vmem [shape: f32[6,2,12], index: 9, kind: output, shape index: {1}]
  %10 = xla_tuple %s8, %s9
  %s11 = sld [smem:[#allocation0]]
  $region65: #{stone_forward.41} parent=0
    _
  %s13 = ssub.s32 1, %s11
  %s14 = scalar_select 0, %s13, %s11
  %s15 = sshll.u32 %s0, 4
  %s16 = int_to_ptr.vmem [resolvable:$true] %s15
  %18 = dma.vmem_to_smem %s16, 16, [#allocation3], [#allocation2]
  %s19 = sshll.u32 %s1, 4
  %s20 = int_to_ptr.vmem [resolvable:$true] %s19
  %22 = dma.vmem_to_smem %s20, 16, [#allocation4], [#allocation2]
  %23 = dma.done [#allocation2], 32
  %24 = sfence
  loop: start=0, step=1, limit=8
  $region2: #{stone_forward.41} parent=0 // loop_pre_header
    _
  $region3: #{stone_forward.41} parent=0 // loop_header
    %s26 = sphi 0, %s30
    %p27 = scmp.ge.s32.totalorder %s26, 8
    %s38 = sphi 0, %s40
    %s41 = sphi 0, %s38
    %s42 = sphi 0, %s41
    %s58 = sphi 0, %s42
    %s62 = sphi 0, %s62
    %s64 = sphi 0, %s62
    %s65 = sphi 0, %s64
    %s79 = sphi 0, %s65
    %s83 = sphi 0, %s83
    %s85 = sphi 0, %s83
    %s86 = sphi 0, %s85
    %s100 = sphi 0, %s86
    %s104 = sphi 0, %s104
    %s106 = sphi 0, %s104
    %s107 = sphi 0, %s106
    %s121 = sphi 0, %s107
    %s125 = sphi 0, %s125
    %s127 = sphi 0, %s125
    %s128 = sphi 0, %s127
    %s142 = sphi 0, %s128
    %s146 = sphi 0, %s146
    %s148 = sphi 0, %s146
    %s149 = sphi 0, %s148
    %s163 = sphi 0, %s149
    %s169 = sphi 0, %s171
    %s172 = sphi 0, %s169
    %s173 = sphi 0, %s172
    %s189 = sphi 0, %s173
    %s195 = sphi 0, %s197
    %s198 = sphi 0, %s195
    %s199 = sphi 0, %s198
    %s215 = sphi 0, %s199
  $region4: #{stone_forward.41} parent=0 // loop_header_branch
    %29 = sbr.rel (%p27) target = $region8
  $region5: #{stone_forward.41} parent=0 // loop_body
    %s31 = ssub.s32 %s26, 1
    %s32 = ssub.s32 %s26, 2
    %s33 = sadd.s32 %s26, 1
    %s34 = sld [smem:[#allocation3 + %s26]]
    %s35 = sld [smem:[#allocation3 + %s33]]
    %s36 = ssub.s32 %s34, %s35
    %p37 = scmp.eq.s32.totalorder %s36, 0
    %s39 = sadd.s32 %s38, 1
    %s40 = scalar_select %p37, %s38, %s39
    %p43 = pneg %p37
    %p44 = scmp.eq.s32.totalorder %s26, 5
    %p45 = por %p43, %p44
    %p46 = scmp.ne.s32.totalorder %s38, %s41
    %p47 = scmp.eq.s32.totalorder %s26, 0
    %p48 = por %p46, %p47
    %p49 = scmp.ne.s32.totalorder %s38, %s41
    %p50 = scmp.eq.s32.totalorder %s31, 5
    %p51 = por %p49, %p50
    %p52 = scmp.ne.s32.totalorder %s41, %s42
    %p53 = scmp.eq.s32.totalorder %s31, 0
    %p54 = por %p52, %p53
    %p55 = scmp.ne.s32.totalorder %s41, %s42
    %p56 = scmp.eq.s32.totalorder %s32, 5
    %p57 = por %p55, %p56
    %p59 = scmp.ne.s32.totalorder %s42, %s58
    %p60 = scmp.eq.s32.totalorder %s32, 0
    %p61 = por %p59, %p60
    %s63 = sadd.s32 %s62, 1
    %p66 = scmp.eq.s32.totalorder %s26, 5
    %p67 = scmp.ne.s32.totalorder %s62, %s64
    %p68 = scmp.eq.s32.totalorder %s26, 0
    %p69 = por %p67, %p68
    %p70 = scmp.ne.s32.totalorder %s62, %s64
    %p71 = scmp.eq.s32.totalorder %s31, 5
    %p72 = por %p70, %p71
    %p73 = scmp.ne.s32.totalorder %s64, %s65
    %p74 = scmp.eq.s32.totalorder %s31, 0
    %p75 = por %p73, %p74
    %p76 = scmp.ne.s32.totalorder %s64, %s65
    %p77 = scmp.eq.s32.totalorder %s32, 5
    %p78 = por %p76, %p77
    %p80 = scmp.ne.s32.totalorder %s65, %s79
    %p81 = scmp.eq.s32.totalorder %s32, 0
    %p82 = por %p80, %p81
    %s84 = sadd.s32 %s83, 1
    %p87 = scmp.eq.s32.totalorder %s26, 5
    %p88 = scmp.ne.s32.totalorder %s83, %s85
    %p89 = scmp.eq.s32.totalorder %s26, 0
    %p90 = por %p88, %p89
    %p91 = scmp.ne.s32.totalorder %s83, %s85
    %p92 = scmp.eq.s32.totalorder %s31, 5
    %p93 = por %p91, %p92
    %p94 = scmp.ne.s32.totalorder %s85, %s86
    %p95 = scmp.eq.s32.totalorder %s31, 0
    %p96 = por %p94, %p95
    %p97 = scmp.ne.s32.totalorder %s85, %s86
    %p98 = scmp.eq.s32.totalorder %s32, 5
    %p99 = por %p97, %p98
    %p101 = scmp.ne.s32.totalorder %s86, %s100
    %p102 = scmp.eq.s32.totalorder %s32, 0
    %p103 = por %p101, %p102
    %s105 = sadd.s32 %s104, 1
    %p108 = scmp.eq.s32.totalorder %s26, 5
    %p109 = scmp.ne.s32.totalorder %s104, %s106
    %p110 = scmp.eq.s32.totalorder %s26, 0
    %p111 = por %p109, %p110
    %p112 = scmp.ne.s32.totalorder %s104, %s106
    %p113 = scmp.eq.s32.totalorder %s31, 5
    %p114 = por %p112, %p113
    %p115 = scmp.ne.s32.totalorder %s106, %s107
    %p116 = scmp.eq.s32.totalorder %s31, 0
    %p117 = por %p115, %p116
    %p118 = scmp.ne.s32.totalorder %s106, %s107
    %p119 = scmp.eq.s32.totalorder %s32, 5
    %p120 = por %p118, %p119
    %p122 = scmp.ne.s32.totalorder %s107, %s121
    %p123 = scmp.eq.s32.totalorder %s32, 0
    %p124 = por %p122, %p123
    %s126 = sadd.s32 %s125, 1
    %p129 = scmp.eq.s32.totalorder %s26, 5
    %p130 = scmp.ne.s32.totalorder %s125, %s127
    %p131 = scmp.eq.s32.totalorder %s26, 0
    %p132 = por %p130, %p131
    %p133 = scmp.ne.s32.totalorder %s125, %s127
    %p134 = scmp.eq.s32.totalorder %s31, 5
    %p135 = por %p133, %p134
    %p136 = scmp.ne.s32.totalorder %s127, %s128
    %p137 = scmp.eq.s32.totalorder %s31, 0
    %p138 = por %p136, %p137
    %p139 = scmp.ne.s32.totalorder %s127, %s128
    %p140 = scmp.eq.s32.totalorder %s32, 5
    %p141 = por %p139, %p140
    %p143 = scmp.ne.s32.totalorder %s128, %s142
    %p144 = scmp.eq.s32.totalorder %s32, 0
    %p145 = por %p143, %p144
    %s147 = sadd.s32 %s146, 1
    %p150 = scmp.eq.s32.totalorder %s26, 5
    %p151 = scmp.ne.s32.totalorder %s146, %s148
    %p152 = scmp.eq.s32.totalorder %s26, 0
    %p153 = por %p151, %p152
    %p154 = scmp.ne.s32.totalorder %s146, %s148
    %p155 = scmp.eq.s32.totalorder %s31, 5
    %p156 = por %p154, %p155
    %p157 = scmp.ne.s32.totalorder %s148, %s149
    %p158 = scmp.eq.s32.totalorder %s31, 0
    %p159 = por %p157, %p158
    %p160 = scmp.ne.s32.totalorder %s148, %s149
    %p161 = scmp.eq.s32.totalorder %s32, 5
    %p162 = por %p160, %p161
    %p164 = scmp.ne.s32.totalorder %s149, %s163
    %p165 = scmp.eq.s32.totalorder %s32, 0
    %p166 = por %p164, %p165
    %s167 = ssub.s32 %s26, %s33
    %p168 = scmp.eq.s32.totalorder %s167, 0
    %s170 = sadd.s32 %s169, 1
    %s171 = scalar_select %p168, %s169, %s170
    %p174 = pneg %p168
    %p175 = scmp.eq.s32.totalorder %s26, 5
    %p176 = por %p174, %p175
    %p177 = scmp.ne.s32.totalorder %s169, %s172
    %p178 = scmp.eq.s32.totalorder %s26, 0
    %p179 = por %p177, %p178
    %p180 = scmp.ne.s32.totalorder %s169, %s172
    %p181 = scmp.eq.s32.totalorder %s31, 5
    %p182 = por %p180, %p181
    %p183 = scmp.ne.s32.totalorder %s172, %s173
    %p184 = scmp.eq.s32.totalorder %s31, 0
    %p185 = por %p183, %p184
    %p186 = scmp.ne.s32.totalorder %s172, %s173
    %p187 = scmp.eq.s32.totalorder %s32, 5
    %p188 = por %p186, %p187
    %p190 = scmp.ne.s32.totalorder %s173, %s189
    %p191 = scmp.eq.s32.totalorder %s32, 0
    %p192 = por %p190, %p191
    %s193 = ssub.s32 %s26, %s33
    %p194 = scmp.eq.s32.totalorder %s193, 0
    %s196 = sadd.s32 %s195, 1
    %s197 = scalar_select %p194, %s195, %s196
    %p200 = pneg %p194
    %p201 = scmp.eq.s32.totalorder %s26, 5
    %p202 = por %p200, %p201
    %p203 = scmp.ne.s32.totalorder %s195, %s198
    %p204 = scmp.eq.s32.totalorder %s26, 0
    %p205 = por %p203, %p204
    %p206 = scmp.ne.s32.totalorder %s195, %s198
    %p207 = scmp.eq.s32.totalorder %s31, 5
    %p208 = por %p206, %p207
    %p209 = scmp.ne.s32.totalorder %s198, %s199
    %p210 = scmp.eq.s32.totalorder %s31, 0
    %p211 = por %p209, %p210
    %p212 = scmp.ne.s32.totalorder %s198, %s199
    %p213 = scmp.eq.s32.totalorder %s32, 5
    %p214 = por %p212, %p213
    %p216 = scmp.ne.s32.totalorder %s199, %s215
    %p217 = scmp.eq.s32.totalorder %s32, 0
    %p218 = por %p216, %p217
    %p219 = scmp.le.s32.totalorder 1, %s26
    %p220 = scmp.lt.s32.totalorder %s26, 7
    %p221 = pnand %p219, %p220
    %p222 = pneg %p221
    // Predicated region
    $region9: #{stone_forward.41} parent=5 // pred_check
      _
    $region10: #{stone_forward.41} parent=5 // pred_check_branch
      %224 = sbr.rel (%p221) target = $region12
    $region11: #{stone_forward.41} parent=5 // pred_region
      %s225 = ssub.s32 %s26, 1
      // Predicated region
      $region13: #{stone_forward.41} parent=11 // pred_check
        %p226 = pneg %p75
      $region14: #{stone_forward.41} parent=11 // pred_check_branch
        %228 = sbr.rel (%p226) target = $region16
      $region15: #{stone_forward.41} parent=11 // pred_region
        _
      $region16: #{stone_forward.41} parent=11 // pred_fallthru
        _
      // Predicated region
      $region17: #{stone_forward.41} parent=11 // pred_check
        %p229 = pneg %p96
      $region18: #{stone_forward.41} parent=11 // pred_check_branch
        %231 = sbr.rel (%p229) target = $region20
      $region19: #{stone_forward.41} parent=11 // pred_region
        _
      $region20: #{stone_forward.41} parent=11 // pred_fallthru
        _
      // Predicated region
      $region21: #{stone_forward.41} parent=11 // pred_check
        %p232 = pneg %p117
      $region22: #{stone_forward.41} parent=11 // pred_check_branch
        %234 = sbr.rel (%p232) target = $region24
      $region23: #{stone_forward.41} parent=11 // pred_region
        _
      $region24: #{stone_forward.41} parent=11 // pred_fallthru
        _
      // Predicated region
      $region25: #{stone_forward.41} parent=11 // pred_check
        %p235 = pneg %p138
      $region26: #{stone_forward.41} parent=11 // pred_check_branch
        %237 = sbr.rel (%p235) target = $region28
      $region27: #{stone_forward.41} parent=11 // pred_region
        _
      $region28: #{stone_forward.41} parent=11 // pred_fallthru
        _
      // Predicated region
      $region29: #{stone_forward.41} parent=11 // pred_check
        %p238 = pneg %p159
      $region30: #{stone_forward.41} parent=11 // pred_check_branch
        %240 = sbr.rel (%p238) target = $region32
      $region31: #{stone_forward.41} parent=11 // pred_region
        _
      $region32: #{stone_forward.41} parent=11 // pred_fallthru
        _
    $region12: #{stone_forward.41} parent=5 // pred_fallthru
      _
    %p241 = scmp.lt.s32.totalorder %s26, 6
    // Predicated region
    $region33: #{stone_forward.41} parent=5 // pred_check
      %p242 = pneg %p241
    $region34: #{stone_forward.41} parent=5 // pred_check_branch
      %244 = sbr.rel (%p242) target = $region36
    $region35: #{stone_forward.41} parent=5 // pred_region
      // Predicated region
      $region37: #{stone_forward.41} parent=35 // pred_check
        %p245 = pneg %p48
      $region38: #{stone_forward.41} parent=35 // pred_check_branch
        %247 = sbr.rel (%p245) target = $region40
      $region39: #{stone_forward.41} parent=35 // pred_region
        %s248 = sld [smem:[#allocation3 + %s26]]
        %p249 = scmp.lt.s32.totalorder %s248, 3
        %s250 = scalar_select %p249, %s248, 3
        %s251 = smul.addr %s250, 2
        %s252 = smul.addr %s251, 8
        %s253 = scalar_lea.vmem %s2, %s252
        %s254 = sld [smem:[#allocation3 + %s26]]
      $region40: #{stone_forward.41} parent=35 // pred_fallthru
        _
    $region36: #{stone_forward.41} parent=5 // pred_fallthru
      _
    %p255 = scmp.le.s32.totalorder 1, %s26
    %p256 = scmp.lt.s32.totalorder %s26, 7
    %p257 = pnand %p255, %p256
    %p258 = pneg %p257
    // Predicated region
    $region41: #{stone_forward.41} parent=5 // pred_check
      _
    $region42: #{stone_forward.41} parent=5 // pred_check_branch
      %260 = sbr.rel (%p257) target = $region44
    $region43: #{stone_forward.41} parent=5 // pred_region
      %s261 = ssub.s32 %s26, 1
      %s262 = sld [smem:[#allocation3 + %s31]]
      %p263 = scmp.lt.s32.totalorder %s262, 3
      %s264 = scalar_select %p263, %s262, 3
      %s265 = smul.addr %s264, 2
      %s266 = smul.addr %s265, 8
      %s267 = scalar_lea.vmem %s2, %s266
      %p268 = pneg %p54
      %p269 = pneg %p51
      %p270 = pneg %p75
      %p271 = pneg %p72
      %p272 = pneg %p96
      %p273 = pneg %p93
      %p274 = pneg %p117
      %p275 = pneg %p114
      %p276 = pneg %p138
      %p277 = pneg %p135
      %p278 = pneg %p159
      %p279 = pneg %p156
      %p280 = pneg %p185
      %p281 = pneg %p182
      %p282 = scmp.lt.s32.totalorder %s31, 5
      %s283 = scalar_select %p282, %s31, 5
      %s284 = smul.addr %s283, 2
      %s285 = smul.addr %s284, 8
      %s286 = scalar_lea.vmem %s8, %s285
      %p287 = pneg %p211
      %p288 = pneg %p208
      %p289 = scmp.lt.s32.totalorder %s31, 5
      %s290 = scalar_select %p289, %s31, 5
      %s291 = smul.addr %s290, 2
      %s292 = scalar_lea.vmem %s9, %s291
      %s293 = sld [smem:[#allocation3 + %s31]]
      %p294 = scmp.lt.s32.totalorder %s293, 3
      %s295 = scalar_select %p294, %s293, 3
      %s296 = smul.addr %s295, 2
      %s297 = smul.addr %s296, 8
      %s298 = scalar_lea.vmem %s2, %s297
      %s299 = sld [smem:[#allocation3 + %s31]]
      %p300 = scmp.lt.s32.totalorder %s31, 5
      %s301 = scalar_select %p300, %s31, 5
      %s302 = smul.addr %s301, 2
      %s303 = smul.addr %s302, 8
      %s304 = scalar_lea.vmem %s8, %s303
      %p305 = scmp.lt.s32.totalorder %s31, 5
      %s306 = scalar_select %p305, %s31, 5
      %s307 = smul.addr %s306, 2
      %s308 = scalar_lea.vmem %s9, %s307
      %s309 = sld [smem:[#allocation4 + %s31]]
      %v310 = vld [vmem:[%s298] sm:$0xff]
      %v311 = vld [vmem:[%s298 + $0x8] sm:$0xff]
      %v312 = vlaneseq
      %v313 = vshrl.u32 %v312, 7
      %v314 = vadd.s32 %v313, 8
      %v315 = vadd.s32 %v313, 16
      %v316 = vadd.s32 %v313, 24
      %v317 = vadd.s32 %v313, 32
      %v318 = vadd.s32 %v313, 40
      %v319 = vadd.s32 %v313, 48
      %v320 = vadd.s32 %v313, 56
      %v321 = vadd.s32 %v313, 64
      %v322 = vadd.s32 %v313, 72
      %v323 = vadd.s32 %v313, 80
      %v324 = vadd.s32 %v313, 88
      %v325 = vadd.s32 %v313, 96
      %v326 = vadd.s32 %v313, 104
      %v327 = vadd.s32 %v313, 112
      %v328 = vadd.s32 %v313, 120
      %v329 = vlaneseq
      %v330 = vand.u32 %v329, 127
      %v331 = vstv %s309
      %v332 = vadd.s32 %v330, %v331
      %vm333 = vcmp.eq.s32.totalorder %v313, %v332
      %vm334 = vcmp.eq.s32.totalorder %v314, %v332
      %vm335 = vcmp.eq.s32.totalorder %v315, %v332
      %vm336 = vcmp.eq.s32.totalorder %v316, %v332
      %vm337 = vcmp.eq.s32.totalorder %v317, %v332
      %vm338 = vcmp.eq.s32.totalorder %v318, %v332
      %vm339 = vcmp.eq.s32.totalorder %v319, %v332
      %vm340 = vcmp.eq.s32.totalorder %v320, %v332
      %vm341 = vcmp.eq.s32.totalorder %v321, %v332
      %vm342 = vcmp.eq.s32.totalorder %v322, %v332
      %vm343 = vcmp.eq.s32.totalorder %v323, %v332
      %vm344 = vcmp.eq.s32.totalorder %v324, %v332
      %vm345 = vcmp.eq.s32.totalorder %v325, %v332
      %vm346 = vcmp.eq.s32.totalorder %v326, %v332
      %vm347 = vcmp.eq.s32.totalorder %v327, %v332
      %vm348 = vcmp.eq.s32.totalorder %v328, %v332
      %v349 = vsel %vm333, 1, 0
      %v350 = vsel %vm334, 1, 0
      %v351 = vsel %vm335, 1, 0
      %v352 = vsel %vm336, 1, 0
      %v353 = vsel %vm337, 1, 0
      %v354 = vsel %vm338, 1, 0
      %v355 = vsel %vm339, 1, 0
      %v356 = vsel %vm340, 1, 0
      %v357 = vsel %vm341, 1, 0
      %v358 = vsel %vm342, 1, 0
      %v359 = vsel %vm343, 1, 0
      %v360 = vsel %vm344, 1, 0
      %v361 = vsel %vm345, 1, 0
      %v362 = vsel %vm346, 1, 0
      %v363 = vsel %vm347, 1, 0
      %v364 = vsel %vm348, 1, 0
      %v365 = vcvt.s32.f32 %v349
      %v366 = vcvt.s32.f32 %v350
      %v367 = vcvt.s32.f32 %v351
      %v368 = vcvt.s32.f32 %v352
      %v369 = vcvt.s32.f32 %v353
      %v370 = vcvt.s32.f32 %v354
      %v371 = vcvt.s32.f32 %v355
      %v372 = vcvt.s32.f32 %v356
      %v373 = vcvt.s32.f32 %v357
      %v374 = vcvt.s32.f32 %v358
      %v375 = vcvt.s32.f32 %v359
      %v376 = vcvt.s32.f32 %v360
      %v377 = vcvt.s32.f32 %v361
      %v378 = vcvt.s32.f32 %v362
      %v379 = vcvt.s32.f32 %v363
      %v380 = vcvt.s32.f32 %v364
      %381 = vmatprep.subr.mxu0 0.0
      %382 = vmatpush1.msra.mxu0 %v365
      %383 = vmatprep.subr.mxu0 0.0
      %384 = vmatpush1.msra.mxu0 %v366
      %385 = vmatprep.subr.mxu0 0.0
      %386 = vmatpush1.msra.mxu0 %v367
      %387 = vmatprep.subr.mxu0 0.0
      %388 = vmatpush1.msra.mxu0 %v368
      %389 = vmatprep.subr.mxu0 0.0
      %390 = vmatpush1.msra.mxu0 %v369
      %391 = vmatprep.subr.mxu0 0.0
      %392 = vmatpush1.msra.mxu0 %v370
      %393 = vmatprep.subr.mxu0 0.0
      %394 = vmatpush1.msra.mxu0 %v371
      %395 = vmatprep.subr.mxu0 0.0
      %396 = vmatpush1.msra.mxu0 %v372
      %397 = vmatprep.subr.mxu0 0.0
      %398 = vmatpush1.msra.mxu0 %v373
      %399 = vmatprep.subr.mxu0 0.0
      %400 = vmatpush1.msra.mxu0 %v374
      %401 = vmatprep.subr.mxu0 0.0
      %402 = vmatpush1.msra.mxu0 %v375
      %403 = vmatprep.subr.mxu0 0.0
      %404 = vmatpush1.msra.mxu0 %v376
      %405 = vmatprep.subr.mxu0 0.0
      %406 = vmatpush1.msra.mxu0 %v377
      %407 = vmatprep.subr.mxu0 0.0
      %408 = vmatpush1.msra.mxu0 %v378
      %409 = vmatprep.subr.mxu0 0.0
      %410 = vmatpush1.msra.mxu0 %v379
      %411 = vmatprep.subr.mxu0 0.0
      %412 = vmatpush1.msra.mxu0 %v380
      %413 = vmatprep.subr.mxu0 0.0
      %414 = vmatpush1.msra.mxu0 0.0
      %415 = vmatprep.subr.mxu0 0.0
      %416 = vmatpush1.msra.mxu0 0.0
      %417 = vmatprep.subr.mxu0 0.0
      %418 = vmatpush1.msra.mxu0 0.0
      %419 = vmatprep.subr.mxu0 0.0
      %420 = vmatpush1.msra.mxu0 0.0
      %421 = vmatprep.subr.mxu0 0.0
      %422 = vmatpush1.msra.mxu0 0.0
      %423 = vmatprep.subr.mxu0 0.0
      %424 = vmatpush1.msra.mxu0 0.0
      %425 = vmatprep.subr.mxu0 0.0
      %426 = vmatpush1.msra.mxu0 0.0
      %427 = vmatprep.subr.mxu0 0.0
      %428 = vmatpush1.msra.mxu0 0.0
      %429 = vmatprep.subr.mxu0 0.0
      %430 = vmatpush1.msra.mxu0 0.0
      %431 = vmatprep.subr.mxu0 0.0
      %432 = vmatpush1.msra.mxu0 0.0
      %433 = vmatprep.subr.mxu0 0.0
      %434 = vmatpush1.msra.mxu0 0.0
      %435 = vmatprep.subr.mxu0 0.0
      %436 = vmatpush1.msra.mxu0 0.0
      %437 = vmatprep.subr.mxu0 0.0
      %438 = vmatpush1.msra.mxu0 0.0
      %439 = vmatprep.subr.mxu0 0.0
      %440 = vmatpush1.msra.mxu0 0.0
      %441 = vmatprep.subr.mxu0 0.0
      %442 = vmatpush1.msra.mxu0 0.0
      %443 = vmatprep.subr.mxu0 0.0
      %444 = vmatpush1.msra.mxu0 0.0
      %445 = vmatprep.mubr.f32.mxu0 0.0
      %446 = vmatmul.mubr.f32.gmra.mrb[0].mxu0 %v310
      %v447 = vpop.f32.mrb[0].mxu0
      %v448 = vadd.f32 0.0, %v447
      %v449 = vpop.f32.mrb[0].mxu0
      %450 = vmatprep.mubr.f32.mxu0 0.0
      %451 = vmatmul.mubr.f32.gmra.mrb[0].mxu0 %v311
      %v452 = vpop.f32.mrb[0].mxu0
      %v453 = vadd.f32 0.0, %v452
      %v454 = vpop.f32.mrb[0].mxu0
      %455 = vdwg.mxu0
      %v456 = vld [vmem:[%s6] sm:$0x3]
      %vm457 = vcmask 130048
      %v459 = vsel %vm457, %v456, 0
      %461 = vmatprep.subr.mxu0 0.0
      %462 = vmatpush1.msra.mxu0 %v448
      %463 = vmatprep.subr.mxu0 0.0
      %464 = vmatpush1.msra.mxu0 %v453
      %465 = vmatprep.subr.mxu0 0.0
      %466 = vmatpush1.msra.mxu0 0.0
      %467 = vmatprep.subr.mxu0 0.0
      %468 = vmatpush1.msra.mxu0 0.0
      %469 = vmatprep.subr.mxu0 0.0
      %470 = vmatpush1.msra.mxu0 0.0
      %471 = vmatprep.subr.mxu0 0.0
      %472 = vmatpush1.msra.mxu0 0.0
      %473 = vmatprep.subr.mxu0 0.0
      %474 = vmatpush1.msra.mxu0 0.0
      %475 = vmatprep.subr.mxu0 0.0
      %476 = vmatpush1.msra.mxu0 0.0
      %477 = vmatprep.subr.mxu0 0.0
      %478 = vmatpush1.msra.mxu0 0.0
      %479 = vmatprep.subr.mxu0 0.0
      %480 = vmatpush1.msra.mxu0 0.0
      %481 = vmatprep.subr.mxu0 0.0
      %482 = vmatpush1.msra.mxu0 0.0
      %483 = vmatprep.subr.mxu0 0.0
      %484 = vmatpush1.msra.mxu0 0.0
      %485 = vmatprep.subr.mxu0 0.0
      %486 = vmatpush1.msra.mxu0 0.0
      %487 = vmatprep.subr.mxu0 0.0
      %488 = vmatpush1.msra.mxu0 0.0
      %489 = vmatprep.subr.mxu0 0.0
      %490 = vmatpush1.msra.mxu0 0.0
      %491 = vmatprep.subr.mxu0 0.0
      %492 = vmatpush1.msra.mxu0 0.0
      %493 = vmatprep.subr.mxu0 0.0
      %494 = vmatpush1.msra.mxu0 0.0
      %495 = vmatprep.subr.mxu0 0.0
      %496 = vmatpush1.msra.mxu0 0.0
      %497 = vmatprep.subr.mxu0 0.0
      %498 = vmatpush1.msra.mxu0 0.0
      %499 = vmatprep.subr.mxu0 0.0
      %500 = vmatpush1.msra.mxu0 0.0
      %501 = vmatprep.subr.mxu0 0.0
      %502 = vmatpush1.msra.mxu0 0.0
      %503 = vmatprep.subr.mxu0 0.0
      %504 = vmatpush1.msra.mxu0 0.0
      %505 = vmatprep.subr.mxu0 0.0
      %506 = vmatpush1.msra.mxu0 0.0
      %507 = vmatprep.subr.mxu0 0.0
      %508 = vmatpush1.msra.mxu0 0.0
      %509 = vmatprep.subr.mxu0 0.0
      %510 = vmatpush1.msra.mxu0 0.0
      %511 = vmatprep.subr.mxu0 0.0
      %512 = vmatpush1.msra.mxu0 0.0
      %513 = vmatprep.subr.mxu0 0.0
      %514 = vmatpush1.msra.mxu0 0.0
      %515 = vmatprep.subr.mxu0 0.0
      %516 = vmatpush1.msra.mxu0 0.0
      %517 = vmatprep.subr.mxu0 0.0
      %518 = vmatpush1.msra.mxu0 0.0
      %519 = vmatprep.subr.mxu0 0.0
      %520 = vmatpush1.msra.mxu0 0.0
      %521 = vmatprep.subr.mxu0 0.0
      %522 = vmatpush1.msra.mxu0 0.0
      %523 = vmatprep.subr.mxu0 0.0
      %524 = vmatpush1.msra.mxu0 0.0
      %525 = vmatprep.mubr.f32.mxu0 0.0
      %526 = vmatmul.mubr.f32.gmra.mrb[0].mxu0 %v459
      %v527 = vpop.f32.mrb[0].mxu0
      %v528 = vadd.f32 0.0, %v527
      %v529 = vpop.f32.mrb[0].mxu0
      %530 = vdwg.mxu0
      %v531 = vld [vmem:[%s7] sm:$0xff]
      %v532 = vld [vmem:[%s7 + $0x8] sm:$0xff]
      %v533 = vld [vmem:[%s7 + $0x10] sm:$0xff]
      %v534 = vld [vmem:[%s7 + $0x18] sm:$0xff]
      %v535 = vld [vmem:[%s7 + $0x20] sm:$0xff]
      %v536 = vld [vmem:[%s7 + $0x28] sm:$0xff]
      %v537 = vld [vmem:[%s7 + $0x30] sm:$0xff]
      %v538 = vld [vmem:[%s7 + $0x38] sm:$0xff]
      %v539 = vld [vmem:[%s7 + $0x40] sm:$0xff]
      %v540 = vld [vmem:[%s7 + $0x48] sm:$0xff]
      %v541 = vld [vmem:[%s7 + $0x50] sm:$0xf]
      %vm542 = vcmask 687104
      %v544 = vsel %vm542, %v528, 0
      %vm546 = vcmask 1043456
      %v548 = vsel %vm546, %v541, 0
      %550 = vmatprep.subr.mxu0 0.0
      %551 = vmatpush1.msra.mxu0 %v531
      %552 = vmatprep.subr.mxu0 0.0
      %553 = vmatpush1.msra.mxu0 %v532
      %554 = vmatprep.subr.mxu0 0.0
      %555 = vmatpush1.msra.mxu0 %v533
      %556 = vmatprep.subr.mxu0 0.0
      %557 = vmatpush1.msra.mxu0 %v534
      %558 = vmatprep.subr.mxu0 0.0
      %559 = vmatpush1.msra.mxu0 %v535
      %560 = vmatprep.subr.mxu0 0.0
      %561 = vmatpush1.msra.mxu0 %v536
      %562 = vmatprep.subr.mxu0 0.0
      %563 = vmatpush1.msra.mxu0 %v537
      %564 = vmatprep.subr.mxu0 0.0
      %565 = vmatpush1.msra.mxu0 %v538
      %566 = vmatprep.subr.mxu0 0.0
      %567 = vmatpush1.msra.mxu0 %v539
      %568 = vmatprep.subr.mxu0 0.0
      %569 = vmatpush1.msra.mxu0 %v540
      %570 = vmatprep.subr.mxu0 0.0
      %571 = vmatpush1.msra.mxu0 %v548
      %572 = vmatprep.subr.mxu0 0.0
      %573 = vmatpush1.msra.mxu0 0.0
      %574 = vmatprep.subr.mxu0 0.0
      %575 = vmatpush1.msra.mxu0 0.0
      %576 = vmatprep.subr.mxu0 0.0
      %577 = vmatpush1.msra.mxu0 0.0
      %578 = vmatprep.subr.mxu0 0.0
      %579 = vmatpush1.msra.mxu0 0.0
      %580 = vmatprep.subr.mxu0 0.0
      %581 = vmatpush1.msra.mxu0 0.0
      %582 = vmatprep.subr.mxu0 0.0
      %583 = vmatpush1.msra.mxu0 0.0
      %584 = vmatprep.subr.mxu0 0.0
      %585 = vmatpush1.msra.mxu0 0.0
      %586 = vmatprep.subr.mxu0 0.0
      %587 = vmatpush1.msra.mxu0 0.0
      %588 = vmatprep.subr.mxu0 0.0
      %589 = vmatpush1.msra.mxu0 0.0
      %590 = vmatprep.subr.mxu0 0.0
      %591 = vmatpush1.msra.mxu0 0.0
      %592 = vmatprep.subr.mxu0 0.0
      %593 = vmatpush1.msra.mxu0 0.0
      %594 = vmatprep.subr.mxu0 0.0
      %595 = vmatpush1.msra.mxu0 0.0
      %596 = vmatprep.subr.mxu0 0.0
      %597 = vmatpush1.msra.mxu0 0.0
      %598 = vmatprep.subr.mxu0 0.0
      %599 = vmatpush1.msra.mxu0 0.0
      %600 = vmatprep.subr.mxu0 0.0
      %601 = vmatpush1.msra.mxu0 0.0
      %602 = vmatprep.subr.mxu0 0.0
      %603 = vmatpush1.msra.mxu0 0.0
      %604 = vmatprep.subr.mxu0 0.0
      %605 = vmatpush1.msra.mxu0 0.0
      %606 = vmatprep.subr.mxu0 0.0
      %607 = vmatpush1.msra.mxu0 0.0
      %608 = vmatprep.subr.mxu0 0.0
      %609 = vmatpush1.msra.mxu0 0.0
      %610 = vmatprep.subr.mxu0 0.0
      %611 = vmatpush1.msra.mxu0 0.0
      %612 = vmatprep.subr.mxu0 0.0
      %613 = vmatpush1.msra.mxu0 0.0
      %614 = vmatprep.mubr.f32.mxu0 0.0
      %615 = vmatmul.mubr.f32.gmra.mrb[0].mxu0 %v544
      %v616 = vpop.f32.mrb[0].mxu0
      %v617 = vadd.f32 0.0, %v616
      %v618 = vpop.f32.mrb[0].mxu0
      %619 = vdwg.mxu0
      %vm620 = vcmask 91136
      %621 = vst.msk [vmem:[%s308] sm:$0x3] %vm620, %v617
      %s622 = scalar_lea.vmem %s3, 64
      %v623 = vld [vmem:[%s622] sm:$0xff]
      %v624 = vld [vmem:[%s622 + $0x8] sm:$0xff]
      %v625 = vld [vmem:[%s622 + $0x10] sm:$0xff]
      %v626 = vld [vmem:[%s622 + $0x18] sm:$0xff]
      %v627 = vld [vmem:[%s622 + $0x20] sm:$0xff]
      %v628 = vld [vmem:[%s622 + $0x28] sm:$0xff]
      %v629 = vld [vmem:[%s622 + $0x30] sm:$0xff]
      %v630 = vld [vmem:[%s622 + $0x38] sm:$0xff]
      %v631 = vld [vmem:[%s3] sm:$0xff]
      %v632 = vld [vmem:[%s3 + $0x8] sm:$0xff]
      %v633 = vld [vmem:[%s3 + $0x10] sm:$0xff]
      %v634 = vld [vmem:[%s3 + $0x18] sm:$0xff]
      %v635 = vld [vmem:[%s3 + $0x20] sm:$0xff]
      %v636 = vld [vmem:[%s3 + $0x28] sm:$0xff]
      %v637 = vld [vmem:[%s3 + $0x30] sm:$0xff]
      %v638 = vld [vmem:[%s3 + $0x38] sm:$0xff]
      %641 = vrot.lane.b32.xlu0 %v448, 1
      %v642 = vpop.permute.xlu0 %641
      %643 = vrot.lane.b32.xlu0 %v453, 1
      %v644 = vpop.permute.xlu0 %643
      %vm647 = vcmask 7168
      %v648 = vsel %vm647, 0.0, %v642
      %v649 = vsel %vm647, 0.0, %v644
      %vm650 = vcmask 695296
      %v651 = vsel %vm650, %v648, 0.0
      %v652 = vsel %vm650, %v649, 0.0
      %v654 = vsel %vm457, %v631, 0
      %v657 = vsel %vm457, %v632, 0
      %v660 = vsel %vm457, %v633, 0
      %v663 = vsel %vm457, %v634, 0
      %v666 = vsel %vm457, %v635, 0
      %v669 = vsel %vm457, %v636, 0
      %v672 = vsel %vm457, %v637, 0
      %v675 = vsel %vm457, %v638, 0
      %677 = vmatprep.subr.mxu0 0.0
      %678 = vmatpush1.msra.mxu0 %v651
      %679 = vmatprep.subr.mxu0 0.0
      %680 = vmatpush1.msra.mxu0 %v652
      %681 = vmatprep.subr.mxu0 0.0
      %682 = vmatpush1.msra.mxu0 0.0
      %683 = vmatprep.subr.mxu0 0.0
      %684 = vmatpush1.msra.mxu0 0.0
      %685 = vmatprep.subr.mxu0 0.0
      %686 = vmatpush1.msra.mxu0 0.0
      %687 = vmatprep.subr.mxu0 0.0
      %688 = vmatpush1.msra.mxu0 0.0
      %689 = vmatprep.subr.mxu0 0.0
      %690 = vmatpush1.msra.mxu0 0.0
      %691 = vmatprep.subr.mxu0 0.0
      %692 = vmatpush1.msra.mxu0 0.0
      %693 = vmatprep.subr.mxu0 0.0
      %694 = vmatpush1.msra.mxu0 0.0
      %695 = vmatprep.subr.mxu0 0.0
      %696 = vmatpush1.msra.mxu0 0.0
      %697 = vmatprep.subr.mxu0 0.0
      %698 = vmatpush1.msra.mxu0 0.0
      %699 = vmatprep.subr.mxu0 0.0
      %700 = vmatpush1.msra.mxu0 0.0
      %701 = vmatprep.subr.mxu0 0.0
      %702 = vmatpush1.msra.mxu0 0.0
      %703 = vmatprep.subr.mxu0 0.0
      %704 = vmatpush1.msra.mxu0 0.0
      %705 = vmatprep.subr.mxu0 0.0
      %706 = vmatpush1.msra.mxu0 0.0
      %707 = vmatprep.subr.mxu0 0.0
      %708 = vmatpush1.msra.mxu0 0.0
      %709 = vmatprep.subr.mxu0 0.0
      %710 = vmatpush1.msra.mxu0 0.0
      %711 = vmatprep.subr.mxu0 0.0
      %712 = vmatpush1.msra.mxu0 0.0
      %713 = vmatprep.subr.mxu0 0.0
      %714 = vmatpush1.msra.mxu0 0.0
      %715 = vmatprep.subr.mxu0 0.0
      %716 = vmatpush1.msra.mxu0 0.0
      %717 = vmatprep.subr.mxu0 0.0
      %718 = vmatpush1.msra.mxu0 0.0
      %719 = vmatprep.subr.mxu0 0.0
      %720 = vmatpush1.msra.mxu0 0.0
      %721 = vmatprep.subr.mxu0 0.0
      %722 = vmatpush1.msra.mxu0 0.0
      %723 = vmatprep.subr.mxu0 0.0
      %724 = vmatpush1.msra.mxu0 0.0
      %725 = vmatprep.subr.mxu0 0.0
      %726 = vmatpush1.msra.mxu0 0.0
      %727 = vmatprep.subr.mxu0 0.0
      %728 = vmatpush1.msra.mxu0 0.0
      %729 = vmatprep.subr.mxu0 0.0
      %730 = vmatpush1.msra.mxu0 0.0
      %731 = vmatprep.subr.mxu0 0.0
      %732 = vmatpush1.msra.mxu0 0.0
      %733 = vmatprep.subr.mxu0 0.0
      %734 = vmatpush1.msra.mxu0 0.0
      %735 = vmatprep.subr.mxu0 0.0
      %736 = vmatpush1.msra.mxu0 0.0
      %737 = vmatprep.subr.mxu0 0.0
      %738 = vmatpush1.msra.mxu0 0.0
      %739 = vmatprep.subr.mxu0 0.0
      %740 = vmatpush1.msra.mxu0 0.0
      %741 = vmatprep.mubr.f32.mxu0 0.0
      %742 = vmatmul.mubr.f32.gmra.mrb[0].mxu0 %v654
      %v743 = vpop.f32.mrb[0].mxu0
      %v744 = vadd.f32 0.0, %v743
      %v745 = vpop.f32.mrb[0].mxu0
      %746 = vmatprep.mubr.f32.mxu0 0.0
      %747 = vmatmul.mubr.f32.gmra.mrb[0].mxu0 %v657
      %v748 = vpop.f32.mrb[0].mxu0
      %v749 = vadd.f32 0.0, %v748
      %v750 = vpop.f32.mrb[0].mxu0
      %751 = vmatprep.mubr.f32.mxu0 0.0
      %752 = vmatmul.mubr.f32.gmra.mrb[0].mxu0 %v660
      %v753 = vpop.f32.mrb[0].mxu0
      %v754 = vadd.f32 0.0, %v753
      %v755 = vpop.f32.mrb[0].mxu0
      %756 = vmatprep.mubr.f32.mxu0 0.0
      %757 = vmatmul.mubr.f32.gmra.mrb[0].mxu0 %v663
      %v758 = vpop.f32.mrb[0].mxu0
      %v759 = vadd.f32 0.0, %v758
      %v760 = vpop.f32.mrb[0].mxu0
      %761 = vmatprep.mubr.f32.mxu0 0.0
      %762 = vmatmul.mubr.f32.gmra.mrb[0].mxu0 %v666
      %v763 = vpop.f32.mrb[0].mxu0
      %v764 = vadd.f32 0.0, %v763
      %v765 = vpop.f32.mrb[0].mxu0
      %766 = vmatprep.mubr.f32.mxu0 0.0
      %767 = vmatmul.mubr.f32.gmra.mrb[0].mxu0 %v669
      %v768 = vpop.f32.mrb[0].mxu0
      %v769 = vadd.f32 0.0, %v768
      %v770 = vpop.f32.mrb[0].mxu0
      %771 = vmatprep.mubr.f32.mxu0 0.0
      %772 = vmatmul.mubr.f32.gmra.mrb[0].mxu0 %v672
      %v773 = vpop.f32.mrb[0].mxu0
      %v774 = vadd.f32 0.0, %v773
      %v775 = vpop.f32.mrb[0].mxu0
      %776 = vmatprep.mubr.f32.mxu0 0.0
      %777 = vmatmul.mubr.f32.gmra.mrb[0].mxu0 %v675
      %v778 = vpop.f32.mrb[0].mxu0
      %v779 = vadd.f32 0.0, %v778
      %v780 = vpop.f32.mrb[0].mxu0
      %781 = vdwg.mxu0
      %v783 = vsel %vm457, %v623, 0
      %v786 = vsel %vm457, %v624, 0
      %v789 = vsel %vm457, %v625, 0
      %v792 = vsel %vm457, %v626, 0
      %v795 = vsel %vm457, %v627, 0
      %v798 = vsel %vm457, %v628, 0
      %v801 = vsel %vm457, %v629, 0
      %v804 = vsel %vm457, %v630, 0
      %806 = vmatprep.subr.mxu0 0.0
      %807 = vmatpush1.msra.mxu0 %v448
      %808 = vmatprep.subr.mxu0 0.0
      %809 = vmatpush1.msra.mxu0 %v453
      %810 = vmatprep.subr.mxu0 0.0
      %811 = vmatpush1.msra.mxu0 0.0
      %812 = vmatprep.subr.mxu0 0.0
      %813 = vmatpush1.msra.mxu0 0.0
      %814 = vmatprep.subr.mxu0 0.0
      %815 = vmatpush1.msra.mxu0 0.0
      %816 = vmatprep.subr.mxu0 0.0
      %817 = vmatpush1.msra.mxu0 0.0
      %818 = vmatprep.subr.mxu0 0.0
      %819 = vmatpush1.msra.mxu0 0.0
      %820 = vmatprep.subr.mxu0 0.0
      %821 = vmatpush1.msra.mxu0 0.0
      %822 = vmatprep.subr.mxu0 0.0
      %823 = vmatpush1.msra.mxu0 0.0
      %824 = vmatprep.subr.mxu0 0.0
      %825 = vmatpush1.msra.mxu0 0.0
      %826 = vmatprep.subr.mxu0 0.0
      %827 = vmatpush1.msra.mxu0 0.0
      %828 = vmatprep.subr.mxu0 0.0
      %829 = vmatpush1.msra.mxu0 0.0
      %830 = vmatprep.subr.mxu0 0.0
      %831 = vmatpush1.msra.mxu0 0.0
      %832 = vmatprep.subr.mxu0 0.0
      %833 = vmatpush1.msra.mxu0 0.0
      %834 = vmatprep.subr.mxu0 0.0
      %835 = vmatpush1.msra.mxu0 0.0
      %836 = vmatprep.subr.mxu0 0.0
      %837 = vmatpush1.msra.mxu0 0.0
      %838 = vmatprep.subr.mxu0 0.0
      %839 = vmatpush1.msra.mxu0 0.0
      %840 = vmatprep.subr.mxu0 0.0
      %841 = vmatpush1.msra.mxu0 0.0
      %842 = vmatprep.subr.mxu0 0.0
      %843 = vmatpush1.msra.mxu0 0.0
      %844 = vmatprep.subr.mxu0 0.0
      %845 = vmatpush1.msra.mxu0 0.0
      %846 = vmatprep.subr.mxu0 0.0
      %847 = vmatpush1.msra.mxu0 0.0
      %848 = vmatprep.subr.mxu0 0.0
      %849 = vmatpush1.msra.mxu0 0.0
      %850 = vmatprep.subr.mxu0 0.0
      %851 = vmatpush1.msra.mxu0 0.0
      %852 = vmatprep.subr.mxu0 0.0
      %853 = vmatpush1.msra.mxu0 0.0
      %854 = vmatprep.subr.mxu0 0.0
      %855 = vmatpush1.msra.mxu0 0.0
      %856 = vmatprep.subr.mxu0 0.0
      %857 = vmatpush1.msra.mxu0 0.0
      %858 = vmatprep.subr.mxu0 0.0
      %859 = vmatpush1.msra.mxu0 0.0
      %860 = vmatprep.subr.mxu0 0.0
      %861 = vmatpush1.msra.mxu0 0.0
      %862 = vmatprep.subr.mxu0 0.0
      %863 = vmatpush1.msra.mxu0 0.0
      %864 = vmatprep.subr.mxu0 0.0
      %865 = vmatpush1.msra.mxu0 0.0
      %866 = vmatprep.subr.mxu0 0.0
      %867 = vmatpush1.msra.mxu0 0.0
      %868 = vmatprep.subr.mxu0 0.0
      %869 = vmatpush1.msra.mxu0 0.0
      %870 = vmatprep.mubr.f32.mxu0 0.0
      %871 = vmatmul.mubr.f32.gmra.mrb[0].mxu0 %v783
      %v872 = vpop.f32.mrb[0].mxu0
      %v873 = vadd.f32 %v744, %v872
      %v874 = vpop.f32.mrb[0].mxu0
      %875 = vmatprep.mubr.f32.mxu0 0.0
      %876 = vmatmul.mubr.f32.gmra.mrb[0].mxu0 %v786
      %v877 = vpop.f32.mrb[0].mxu0
      %v878 = vadd.f32 %v749, %v877
      %v879 = vpop.f32.mrb[0].mxu0
      %880 = vmatprep.mubr.f32.mxu0 0.0
      %881 = vmatmul.mubr.f32.gmra.mrb[0].mxu0 %v789
      %v882 = vpop.f32.mrb[0].mxu0
      %v883 = vadd.f32 %v754, %v882
      %v884 = vpop.f32.mrb[0].mxu0
      %885 = vmatprep.mubr.f32.mxu0 0.0
      %886 = vmatmul.mubr.f32.gmra.mrb[0].mxu0 %v792
      %v887 = vpop.f32.mrb[0].mxu0
      %v888 = vadd.f32 %v759, %v887
      %v889 = vpop.f32.mrb[0].mxu0
      %890 = vmatprep.mubr.f32.mxu0 0.0
      %891 = vmatmul.mubr.f32.gmra.mrb[0].mxu0 %v795
      %v892 = vpop.f32.mrb[0].mxu0
      %v893 = vadd.f32 %v764, %v892
      %v894 = vpop.f32.mrb[0].mxu0
      %895 = vmatprep.mubr.f32.mxu0 0.0
      %896 = vmatmul.mubr.f32.gmra.mrb[0].mxu0 %v798
      %v897 = vpop.f32.mrb[0].mxu0
      %v898 = vadd.f32 %v769, %v897
      %v899 = vpop.f32.mrb[0].mxu0
      %900 = vmatprep.mubr.f32.mxu0 0.0
      %901 = vmatmul.mubr.f32.gmra.mrb[0].mxu0 %v801
      %v902 = vpop.f32.mrb[0].mxu0
      %v903 = vadd.f32 %v774, %v902
      %v904 = vpop.f32.mrb[0].mxu0
      %905 = vmatprep.mubr.f32.mxu0 0.0
      %906 = vmatmul.mubr.f32.gmra.mrb[0].mxu0 %v804
      %v907 = vpop.f32.mrb[0].mxu0
      %v908 = vadd.f32 %v779, %v907
      %v909 = vpop.f32.mrb[0].mxu0
      %910 = vdwg.mxu0
      %s911 = scalar_lea.vmem %s3, 128
      %v912 = vld [vmem:[%s911] sm:$0xff]
      %v913 = vld [vmem:[%s911 + $0x8] sm:$0xff]
      %v914 = vld [vmem:[%s911 + $0x10] sm:$0xff]
      %v915 = vld [vmem:[%s911 + $0x18] sm:$0xff]
      %v916 = vld [vmem:[%s911 + $0x20] sm:$0xff]
      %v917 = vld [vmem:[%s911 + $0x28] sm:$0xff]
      %v918 = vld [vmem:[%s911 + $0x30] sm:$0xff]
      %v919 = vld [vmem:[%s911 + $0x38] sm:$0xff]
      %922 = vrot.lane.b32.xlu0 %v651, 126
      %v923 = vpop.permute.xlu0 %922
      %924 = vrot.lane.b32.xlu0 %v652, 126
      %v925 = vpop.permute.xlu0 %924
      %v929 = vsel %vm457, %v912, 0
      %v932 = vsel %vm457, %v913, 0
      %v935 = vsel %vm457, %v914, 0
      %v938 = vsel %vm457, %v915, 0
      %v941 = vsel %vm457, %v916, 0
      %v944 = vsel %vm457, %v917, 0
      %v947 = vsel %vm457, %v918, 0
      %v950 = vsel %vm457, %v919, 0
      %952 = vmatprep.subr.mxu0 0.0
      %953 = vmatpush1.msra.mxu0 %v923
      %954 = vmatprep.subr.mxu0 0.0
      %955 = vmatpush1.msra.mxu0 %v925
      %956 = vmatprep.subr.mxu0 0.0
      %957 = vmatpush1.msra.mxu0 0.0
      %958 = vmatprep.subr.mxu0 0.0
      %959 = vmatpush1.msra.mxu0 0.0
      %960 = vmatprep.subr.mxu0 0.0
      %961 = vmatpush1.msra.mxu0 0.0
      %962 = vmatprep.subr.mxu0 0.0
      %963 = vmatpush1.msra.mxu0 0.0
      %964 = vmatprep.subr.mxu0 0.0
      %965 = vmatpush1.msra.mxu0 0.0
      %966 = vmatprep.subr.mxu0 0.0
      %967 = vmatpush1.msra.mxu0 0.0
      %968 = vmatprep.subr.mxu0 0.0
      %969 = vmatpush1.msra.mxu0 0.0
      %970 = vmatprep.subr.mxu0 0.0
      %971 = vmatpush1.msra.mxu0 0.0
      %972 = vmatprep.subr.mxu0 0.0
      %973 = vmatpush1.msra.mxu0 0.0
      %974 = vmatprep.subr.mxu0 0.0
      %975 = vmatpush1.msra.mxu0 0.0
      %976 = vmatprep.subr.mxu0 0.0
      %977 = vmatpush1.msra.mxu0 0.0
      %978 = vmatprep.subr.mxu0 0.0
      %979 = vmatpush1.msra.mxu0 0.0
      %980 = vmatprep.subr.mxu0 0.0
      %981 = vmatpush1.msra.mxu0 0.0
      %982 = vmatprep.subr.mxu0 0.0
      %983 = vmatpush1.msra.mxu0 0.0
      %984 = vmatprep.subr.mxu0 0.0
      %985 = vmatpush1.msra.mxu0 0.0
      %986 = vmatprep.subr.mxu0 0.0
      %987 = vmatpush1.msra.mxu0 0.0
      %988 = vmatprep.subr.mxu0 0.0
      %989 = vmatpush1.msra.mxu0 0.0
      %990 = vmatprep.subr.mxu0 0.0
      %991 = vmatpush1.msra.mxu0 0.0
      %992 = vmatprep.subr.mxu0 0.0
      %993 = vmatpush1.msra.mxu0 0.0
      %994 = vmatprep.subr.mxu0 0.0
      %995 = vmatpush1.msra.mxu0 0.0
      %996 = vmatprep.subr.mxu0 0.0
      %997 = vmatpush1.msra.mxu0 0.0
      %998 = vmatprep.subr.mxu0 0.0
      %999 = vmatpush1.msra.mxu0 0.0
      %1000 = vmatprep.subr.mxu0 0.0
      %1001 = vmatpush1.msra.mxu0 0.0
      %1002 = vmatprep.subr.mxu0 0.0
      %1003 = vmatpush1.msra.mxu0 0.0
      %1004 = vmatprep.subr.mxu0 0.0
      %1005 = vmatpush1.msra.mxu0 0.0
      %1006 = vmatprep.subr.mxu0 0.0
      %1007 = vmatpush1.msra.mxu0 0.0
      %1008 = vmatprep.subr.mxu0 0.0
      %1009 = vmatpush1.msra.mxu0 0.0
      %1010 = vmatprep.subr.mxu0 0.0
      %1011 = vmatpush1.msra.mxu0 0.0
      %1012 = vmatprep.subr.mxu0 0.0
      %1013 = vmatpush1.msra.mxu0 0.0
      %1014 = vmatprep.subr.mxu0 0.0
      %1015 = vmatpush1.msra.mxu0 0.0
      %1016 = vmatprep.mubr.f32.mxu0 0.0
      %1017 = vmatmul.mubr.f32.gmra.mrb[0].mxu0 %v929
      %v1018 = vpop.f32.mrb[0].mxu0
      %v1019 = vadd.f32 0.0, %v1018
      %v1020 = vpop.f32.mrb[0].mxu0
      %1021 = vmatprep.mubr.f32.mxu0 0.0
      %1022 = vmatmul.mubr.f32.gmra.mrb[0].mxu0 %v932
      %v1023 = vpop.f32.mrb[0].mxu0
      %v1024 = vadd.f32 0.0, %v1023
      %v1025 = vpop.f32.mrb[0].mxu0
      %1026 = vmatprep.mubr.f32.mxu0 0.0
      %1027 = vmatmul.mubr.f32.gmra.mrb[0].mxu0 %v935
      %v1028 = vpop.f32.mrb[0].mxu0
      %v1029 = vadd.f32 0.0, %v1028
      %v1030 = vpop.f32.mrb[0].mxu0
      %1031 = vmatprep.mubr.f32.mxu0 0.0
      %1032 = vmatmul.mubr.f32.gmra.mrb[0].mxu0 %v938
      %v1033 = vpop.f32.mrb[0].mxu0
      %v1034 = vadd.f32 0.0, %v1033
      %v1035 = vpop.f32.mrb[0].mxu0
      %1036 = vmatprep.mubr.f32.mxu0 0.0
      %1037 = vmatmul.mubr.f32.gmra.mrb[0].mxu0 %v941
      %v1038 = vpop.f32.mrb[0].mxu0
      %v1039 = vadd.f32 0.0, %v1038
      %v1040 = vpop.f32.mrb[0].mxu0
      %1041 = vmatprep.mubr.f32.mxu0 0.0
      %1042 = vmatmul.mubr.f32.gmra.mrb[0].mxu0 %v944
      %v1043 = vpop.f32.mrb[0].mxu0
      %v1044 = vadd.f32 0.0, %v1043
      %v1045 = vpop.f32.mrb[0].mxu0
      %1046 = vmatprep.mubr.f32.mxu0 0.0
      %1047 = vmatmul.mubr.f32.gmra.mrb[0].mxu0 %v947
      %v1048 = vpop.f32.mrb[0].mxu0
      %v1049 = vadd.f32 0.0, %v1048
      %v1050 = vpop.f32.mrb[0].mxu0
      %1051 = vmatprep.mubr.f32.mxu0 0.0
      %1052 = vmatmul.mubr.f32.gmra.mrb[0].mxu0 %v950
      %v1053 = vpop.f32.mrb[0].mxu0
      %v1054 = vadd.f32 0.0, %v1053
      %v1055 = vpop.f32.mrb[0].mxu0
      %1056 = vdwg.mxu0
      %v1057 = vadd.f32 %v873, %v1019
      %v1058 = vadd.f32 %v878, %v1024
      %v1059 = vadd.f32 %v883, %v1029
      %v1060 = vadd.f32 %v888, %v1034
      %v1061 = vadd.f32 %v893, %v1039
      %v1062 = vadd.f32 %v898, %v1044
      %v1063 = vadd.f32 %v903, %v1049
      %v1064 = vadd.f32 %v908, %v1054
      %v1065 = vmax.f32 %v1057, 0.0
      %v1066 = vmax.f32 %v1058, 0.0
      %v1067 = vmax.f32 %v1059, 0.0
      %v1068 = vmax.f32 %v1060, 0.0
      %v1069 = vmax.f32 %v1061, 0.0
      %v1070 = vmax.f32 %v1062, 0.0
      %v1071 = vmax.f32 %v1063, 0.0
      %v1072 = vmax.f32 %v1064, 0.0
      %s1073 = scalar_lea.vmem %s4, 128
      %v1074 = vld [vmem:[%s1073] sm:$0xff]
      %v1075 = vld [vmem:[%s1073 + $0x8] sm:$0xff]
      %v1076 = vld [vmem:[%s1073 + $0x10] sm:$0xff]
      %v1077 = vld [vmem:[%s1073 + $0x18] sm:$0xff]
      %v1078 = vld [vmem:[%s1073 + $0x20] sm:$0xff]
      %v1079 = vld [vmem:[%s1073 + $0x28] sm:$0xff]
      %v1080 = vld [vmem:[%s1073 + $0x30] sm:$0xff]
      %v1081 = vld [vmem:[%s1073 + $0x38] sm:$0xff]
      %v1082 = vld [vmem:[%s1073 + $0x40] sm:$0xff]
      %v1083 = vld [vmem:[%s1073 + $0x48] sm:$0xff]
      %v1084 = vld [vmem:[%s1073 + $0x50] sm:$0xff]
      %v1085 = vld [vmem:[%s1073 + $0x58] sm:$0xff]
      %v1086 = vld [vmem:[%s1073 + $0x60] sm:$0xff]
      %v1087 = vld [vmem:[%s1073 + $0x68] sm:$0xff]
      %v1088 = vld [vmem:[%s1073 + $0x70] sm:$0xff]
      %v1089 = vld [vmem:[%s1073 + $0x78] sm:$0xff]
      %v1090 = vld [vmem:[%s4] sm:$0xff]
      %v1091 = vld [vmem:[%s4 + $0x8] sm:$0xff]
      %v1092 = vld [vmem:[%s4 + $0x10] sm:$0xff]
      %v1093 = vld [vmem:[%s4 + $0x18] sm:$0xff]
      %v1094 = vld [vmem:[%s4 + $0x20] sm:$0xff]
      %v1095 = vld [vmem:[%s4 + $0x28] sm:$0xff]
      %v1096 = vld [vmem:[%s4 + $0x30] sm:$0xff]
      %v1097 = vld [vmem:[%s4 + $0x38] sm:$0xff]
      %v1098 = vld [vmem:[%s4 + $0x40] sm:$0xff]
      %v1099 = vld [vmem:[%s4 + $0x48] sm:$0xff]
      %v1100 = vld [vmem:[%s4 + $0x50] sm:$0xff]
      %v1101 = vld [vmem:[%s4 + $0x58] sm:$0xff]
      %v1102 = vld [vmem:[%s4 + $0x60] sm:$0xff]
      %v1103 = vld [vmem:[%s4 + $0x68] sm:$0xff]
      %v1104 = vld [vmem:[%s4 + $0x70] sm:$0xff]
      %v1105 = vld [vmem:[%s4 + $0x78] sm:$0xff]
      %1114 = vrot.lane.b32.xlu0 %v1065, 1
      %v1115 = vpop.permute.xlu0 %1114
      %1116 = vrot.lane.b32.xlu0 %v1066, 1
      %v1117 = vpop.permute.xlu0 %1116
      %1118 = vrot.lane.b32.xlu0 %v1067, 1
      %v1119 = vpop.permute.xlu0 %1118
      %1120 = vrot.lane.b32.xlu0 %v1068, 1
      %v1121 = vpop.permute.xlu0 %1120
      %1122 = vrot.lane.b32.xlu0 %v1069, 1
      %v1123 = vpop.permute.xlu0 %1122
      %1124 = vrot.lane.b32.xlu0 %v1070, 1
      %v1125 = vpop.permute.xlu0 %1124
      %1126 = vrot.lane.b32.xlu0 %v1071, 1
      %v1127 = vpop.permute.xlu0 %1126
      %1128 = vrot.lane.b32.xlu0 %v1072, 1
      %v1129 = vpop.permute.xlu0 %1128
      %v1138 = vsel %vm647, 0.0, %v1115
      %v1139 = vsel %vm647, 0.0, %v1117
      %v1140 = vsel %vm647, 0.0, %v1119
      %v1141 = vsel %vm647, 0.0, %v1121
      %v1142 = vsel %vm647, 0.0, %v1123
      %v1143 = vsel %vm647, 0.0, %v1125
      %v1144 = vsel %vm647, 0.0, %v1127
      %v1145 = vsel %vm647, 0.0, %v1129
      %v1146 = vsel %vm650, %v1138, 0.0
      %v1147 = vsel %vm650, %v1139, 0.0
      %v1148 = vsel %vm650, %v1140, 0.0
      %v1149 = vsel %vm650, %v1141, 0.0
      %v1150 = vsel %vm650, %v1142, 0.0
      %v1151 = vsel %vm650, %v1143, 0.0
      %v1152 = vsel %vm650, %v1144, 0.0
      %v1153 = vsel %vm650, %v1145, 0.0
      %vm1154 = vcmask 523264
      %v1156 = vsel %vm1154, %v1090, 0
      %v1159 = vsel %vm1154, %v1091, 0
      %v1162 = vsel %vm1154, %v1092, 0
      %v1165 = vsel %vm1154, %v1093, 0
      %v1168 = vsel %vm1154, %v1094, 0
      %v1171 = vsel %vm1154, %v1095, 0
      %v1174 = vsel %vm1154, %v1096, 0
      %v1177 = vsel %vm1154, %v1097, 0
      %v1180 = vsel %vm1154, %v1098, 0
      %v1183 = vsel %vm1154, %v1099, 0
      %v1186 = vsel %vm1154, %v1100, 0
      %v1189 = vsel %vm1154, %v1101, 0
      %v1192 = vsel %vm1154, %v1102, 0
      %v1195 = vsel %vm1154, %v1103, 0
      %v1198 = vsel %vm1154, %v1104, 0
      %v1201 = vsel %vm1154, %v1105, 0
      %1203 = vmatprep.subr.mxu0 0.0
      %1204 = vmatpush1.msra.mxu0 %v1146
      %1205 = vmatprep.subr.mxu0 0.0
      %1206 = vmatpush1.msra.mxu0 %v1147
      %1207 = vmatprep.subr.mxu0 0.0
      %1208 = vmatpush1.msra.mxu0 %v1148
      %1209 = vmatprep.subr.mxu0 0.0
      %1210 = vmatpush1.msra.mxu0 %v1149
      %1211 = vmatprep.subr.mxu0 0.0
      %1212 = vmatpush1.msra.mxu0 %v1150
      %1213 = vmatprep.subr.mxu0 0.0
      %1214 = vmatpush1.msra.mxu0 %v1151
      %1215 = vmatprep.subr.mxu0 0.0
      %1216 = vmatpush1.msra.mxu0 %v1152
      %1217 = vmatprep.subr.mxu0 0.0
      %1218 = vmatpush1.msra.mxu0 %v1153
      %1219 = vmatprep.subr.mxu0 0.0
      %1220 = vmatpush1.msra.mxu0 0.0
      %1221 = vmatprep.subr.mxu0 0.0
      %1222 = vmatpush1.msra.mxu0 0.0
      %1223 = vmatprep.subr.mxu0 0.0
      %1224 = vmatpush1.msra.mxu0 0.0
      %1225 = vmatprep.subr.mxu0 0.0
      %1226 = vmatpush1.msra.mxu0 0.0
      %1227 = vmatprep.subr.mxu0 0.0
      %1228 = vmatpush1.msra.mxu0 0.0
      %1229 = vmatprep.subr.mxu0 0.0
      %1230 = vmatpush1.msra.mxu0 0.0
      %1231 = vmatprep.subr.mxu0 0.0
      %1232 = vmatpush1.msra.mxu0 0.0
      %1233 = vmatprep.subr.mxu0 0.0
      %1234 = vmatpush1.msra.mxu0 0.0
      %1235 = vmatprep.subr.mxu0 0.0
      %1236 = vmatpush1.msra.mxu0 0.0
      %1237 = vmatprep.subr.mxu0 0.0
      %1238 = vmatpush1.msra.mxu0 0.0
      %1239 = vmatprep.subr.mxu0 0.0
      %1240 = vmatpush1.msra.mxu0 0.0
      %1241 = vmatprep.subr.mxu0 0.0
      %1242 = vmatpush1.msra.mxu0 0.0
      %1243 = vmatprep.subr.mxu0 0.0
      %1244 = vmatpush1.msra.mxu0 0.0
      %1245 = vmatprep.subr.mxu0 0.0
      %1246 = vmatpush1.msra.mxu0 0.0
      %1247 = vmatprep.subr.mxu0 0.0
      %1248 = vmatpush1.msra.mxu0 0.0
      %1249 = vmatprep.subr.mxu0 0.0
      %1250 = vmatpush1.msra.mxu0 0.0
      %1251 = vmatprep.subr.mxu0 0.0
      %1252 = vmatpush1.msra.mxu0 0.0
      %1253 = vmatprep.subr.mxu0 0.0
      %1254 = vmatpush1.msra.mxu0 0.0
      %1255 = vmatprep.subr.mxu0 0.0
      %1256 = vmatpush1.msra.mxu0 0.0
      %1257 = vmatprep.subr.mxu0 0.0
      %1258 = vmatpush1.msra.mxu0 0.0
      %1259 = vmatprep.subr.mxu0 0.0
      %1260 = vmatpush1.msra.mxu0 0.0
      %1261 = vmatprep.subr.mxu0 0.0
      %1262 = vmatpush1.msra.mxu0 0.0
      %1263 = vmatprep.subr.mxu0 0.0
      %1264 = vmatpush1.msra.mxu0 0.0
      %1265 = vmatprep.subr.mxu0 0.0
      %1266 = vmatpush1.msra.mxu0 0.0
      %1267 = vmatprep.mubr.f32.mxu0 0.0
      %1268 = vmatmul.mubr.f32.gmra.mrb[0].mxu0 %v1156
      %v1269 = vpop.f32.mrb[0].mxu0
      %v1270 = vadd.f32 0.0, %v1269
      %v1271 = vpop.f32.mrb[0].mxu0
      %1272 = vmatprep.mubr.f32.mxu0 0.0
      %1273 = vmatmul.mubr.f32.gmra.mrb[0].mxu0 %v1159
      %v1274 = vpop.f32.mrb[0].mxu0
      %v1275 = vadd.f32 0.0, %v1274
      %v1276 = vpop.f32.mrb[0].mxu0
      %1277 = vmatprep.mubr.f32.mxu0 0.0
      %1278 = vmatmul.mubr.f32.gmra.mrb[0].mxu0 %v1162
      %v1279 = vpop.f32.mrb[0].mxu0
      %v1280 = vadd.f32 0.0, %v1279
      %v1281 = vpop.f32.mrb[0].mxu0
      %1282 = vmatprep.mubr.f32.mxu0 0.0
      %1283 = vmatmul.mubr.f32.gmra.mrb[0].mxu0 %v1165
      %v1284 = vpop.f32.mrb[0].mxu0
      %v1285 = vadd.f32 0.0, %v1284
      %v1286 = vpop.f32.mrb[0].mxu0
      %1287 = vmatprep.mubr.f32.mxu0 0.0
      %1288 = vmatmul.mubr.f32.gmra.mrb[0].mxu0 %v1168
      %v1289 = vpop.f32.mrb[0].mxu0
      %v1290 = vadd.f32 0.0, %v1289
      %v1291 = vpop.f32.mrb[0].mxu0
      %1292 = vmatprep.mubr.f32.mxu0 0.0
      %1293 = vmatmul.mubr.f32.gmra.mrb[0].mxu0 %v1171
      %v1294 = vpop.f32.mrb[0].mxu0
      %v1295 = vadd.f32 0.0, %v1294
      %v1296 = vpop.f32.mrb[0].mxu0
      %1297 = vmatprep.mubr.f32.mxu0 0.0
      %1298 = vmatmul.mubr.f32.gmra.mrb[0].mxu0 %v1174
      %v1299 = vpop.f32.mrb[0].mxu0
      %v1300 = vadd.f32 0.0, %v1299
      %v1301 = vpop.f32.mrb[0].mxu0
      %1302 = vmatprep.mubr.f32.mxu0 0.0
      %1303 = vmatmul.mubr.f32.gmra.mrb[0].mxu0 %v1177
      %v1304 = vpop.f32.mrb[0].mxu0
      %v1305 = vadd.f32 0.0, %v1304
      %v1306 = vpop.f32.mrb[0].mxu0
      %1307 = vmatprep.mubr.f32.mxu0 0.0
      %1308 = vmatmul.mubr.f32.gmra.mrb[0].mxu0 %v1180
      %v1309 = vpop.f32.mrb[0].mxu0
      %v1310 = vadd.f32 0.0, %v1309
      %v1311 = vpop.f32.mrb[0].mxu0
      %1312 = vmatprep.mubr.f32.mxu0 0.0
      %1313 = vmatmul.mubr.f32.gmra.mrb[0].mxu0 %v1183
      %v1314 = vpop.f32.mrb[0].mxu0
      %v1315 = vadd.f32 0.0, %v1314
      %v1316 = vpop.f32.mrb[0].mxu0
      %1317 = vmatprep.mubr.f32.mxu0 0.0
      %1318 = vmatmul.mubr.f32.gmra.mrb[0].mxu0 %v1186
      %v1319 = vpop.f32.mrb[0].mxu0
      %v1320 = vadd.f32 0.0, %v1319
      %v1321 = vpop.f32.mrb[0].mxu0
      %1322 = vmatprep.mubr.f32.mxu0 0.0
      %1323 = vmatmul.mubr.f32.gmra.mrb[0].mxu0 %v1189
      %v1324 = vpop.f32.mrb[0].mxu0
      %v1325 = vadd.f32 0.0, %v1324
      %v1326 = vpop.f32.mrb[0].mxu0
      %1327 = vmatprep.mubr.f32.mxu0 0.0
      %1328 = vmatmul.mubr.f32.gmra.mrb[0].mxu0 %v1192
      %v1329 = vpop.f32.mrb[0].mxu0
      %v1330 = vadd.f32 0.0, %v1329
      %v1331 = vpop.f32.mrb[0].mxu0
      %1332 = vmatprep.mubr.f32.mxu0 0.0
      %1333 = vmatmul.mubr.f32.gmra.mrb[0].mxu0 %v1195
      %v1334 = vpop.f32.mrb[0].mxu0
      %v1335 = vadd.f32 0.0, %v1334
      %v1336 = vpop.f32.mrb[0].mxu0
      %1337 = vmatprep.mubr.f32.mxu0 0.0
      %1338 = vmatmul.mubr.f32.gmra.mrb[0].mxu0 %v1198
      %v1339 = vpop.f32.mrb[0].mxu0
      %v1340 = vadd.f32 0.0, %v1339
      %v1341 = vpop.f32.mrb[0].mxu0
      %1342 = vmatprep.mubr.f32.mxu0 0.0
      %1343 = vmatmul.mubr.f32.gmra.mrb[0].mxu0 %v1201
      %v1344 = vpop.f32.mrb[0].mxu0
      %v1345 = vadd.f32 0.0, %v1344
      %v1346 = vpop.f32.mrb[0].mxu0
      %1347 = vdwg.mxu0
      %v1349 = vsel %vm1154, %v1074, 0
      %v1352 = vsel %vm1154, %v1075, 0
      %v1355 = vsel %vm1154, %v1076, 0
      %v1358 = vsel %vm1154, %v1077, 0
      %v1361 = vsel %vm1154, %v1078, 0
      %v1364 = vsel %vm1154, %v1079, 0
      %v1367 = vsel %vm1154, %v1080, 0
      %v1370 = vsel %vm1154, %v1081, 0
      %v1373 = vsel %vm1154, %v1082, 0
      %v1376 = vsel %vm1154, %v1083, 0
      %v1379 = vsel %vm1154, %v1084, 0
      %v1382 = vsel %vm1154, %v1085, 0
      %v1385 = vsel %vm1154, %v1086, 0
      %v1388 = vsel %vm1154, %v1087, 0
      %v1391 = vsel %vm1154, %v1088, 0
      %v1394 = vsel %vm1154, %v1089, 0
      %1396 = vmatprep.subr.mxu0 0.0
      %1397 = vmatpush1.msra.mxu0 %v1065
      %1398 = vmatprep.subr.mxu0 0.0
      %1399 = vmatpush1.msra.mxu0 %v1066
      %1400 = vmatprep.subr.mxu0 0.0
      %1401 = vmatpush1.msra.mxu0 %v1067
      %1402 = vmatprep.subr.mxu0 0.0
      %1403 = vmatpush1.msra.mxu0 %v1068
      %1404 = vmatprep.subr.mxu0 0.0
      %1405 = vmatpush1.msra.mxu0 %v1069
      %1406 = vmatprep.subr.mxu0 0.0
      %1407 = vmatpush1.msra.mxu0 %v1070
      %1408 = vmatprep.subr.mxu0 0.0
      %1409 = vmatpush1.msra.mxu0 %v1071
      %1410 = vmatprep.subr.mxu0 0.0
      %1411 = vmatpush1.msra.mxu0 %v1072
      %1412 = vmatprep.subr.mxu0 0.0
      %1413 = vmatpush1.msra.mxu0 0.0
      %1414 = vmatprep.subr.mxu0 0.0
      %1415 = vmatpush1.msra.mxu0 0.0
      %1416 = vmatprep.subr.mxu0 0.0
      %1417 = vmatpush1.msra.mxu0 0.0
      %1418 = vmatprep.subr.mxu0 0.0
      %1419 = vmatpush1.msra.mxu0 0.0
      %1420 = vmatprep.subr.mxu0 0.0
      %1421 = vmatpush1.msra.mxu0 0.0
      %1422 = vmatprep.subr.mxu0 0.0
      %1423 = vmatpush1.msra.mxu0 0.0
      %1424 = vmatprep.subr.mxu0 0.0
      %1425 = vmatpush1.msra.mxu0 0.0
      %1426 = vmatprep.subr.mxu0 0.0
      %1427 = vmatpush1.msra.mxu0 0.0
      %1428 = vmatprep.subr.mxu0 0.0
      %1429 = vmatpush1.msra.mxu0 0.0
      %1430 = vmatprep.subr.mxu0 0.0
      %1431 = vmatpush1.msra.mxu0 0.0
      %1432 = vmatprep.subr.mxu0 0.0
      %1433 = vmatpush1.msra.mxu0 0.0
      %1434 = vmatprep.subr.mxu0 0.0
      %1435 = vmatpush1.msra.mxu0 0.0
      %1436 = vmatprep.subr.mxu0 0.0
      %1437 = vmatpush1.msra.mxu0 0.0
      %1438 = vmatprep.subr.mxu0 0.0
      %1439 = vmatpush1.msra.mxu0 0.0
      %1440 = vmatprep.subr.mxu0 0.0
      %1441 = vmatpush1.msra.mxu0 0.0
      %1442 = vmatprep.subr.mxu0 0.0
      %1443 = vmatpush1.msra.mxu0 0.0
      %1444 = vmatprep.subr.mxu0 0.0
      %1445 = vmatpush1.msra.mxu0 0.0
      %1446 = vmatprep.subr.mxu0 0.0
      %1447 = vmatpush1.msra.mxu0 0.0
      %1448 = vmatprep.subr.mxu0 0.0
      %1449 = vmatpush1.msra.mxu0 0.0
      %1450 = vmatprep.subr.mxu0 0.0
      %1451 = vmatpush1.msra.mxu0 0.0
      %1452 = vmatprep.subr.mxu0 0.0
      %1453 = vmatpush1.msra.mxu0 0.0
      %1454 = vmatprep.subr.mxu0 0.0
      %1455 = vmatpush1.msra.mxu0 0.0
      %1456 = vmatprep.subr.mxu0 0.0
      %1457 = vmatpush1.msra.mxu0 0.0
      %1458 = vmatprep.subr.mxu0 0.0
      %1459 = vmatpush1.msra.mxu0 0.0
      %1460 = vmatprep.mubr.f32.mxu0 0.0
      %1461 = vmatmul.mubr.f32.gmra.mrb[0].mxu0 %v1349
      %v1462 = vpop.f32.mrb[0].mxu0
      %v1463 = vadd.f32 %v1270, %v1462
      %v1464 = vpop.f32.mrb[0].mxu0
      %1465 = vmatprep.mubr.f32.mxu0 0.0
      %1466 = vmatmul.mubr.f32.gmra.mrb[0].mxu0 %v1352
      %v1467 = vpop.f32.mrb[0].mxu0
      %v1468 = vadd.f32 %v1275, %v1467
      %v1469 = vpop.f32.mrb[0].mxu0
      %1470 = vmatprep.mubr.f32.mxu0 0.0
      %1471 = vmatmul.mubr.f32.gmra.mrb[0].mxu0 %v1355
      %v1472 = vpop.f32.mrb[0].mxu0
      %v1473 = vadd.f32 %v1280, %v1472
      %v1474 = vpop.f32.mrb[0].mxu0
      %1475 = vmatprep.mubr.f32.mxu0 0.0
      %1476 = vmatmul.mubr.f32.gmra.mrb[0].mxu0 %v1358
      %v1477 = vpop.f32.mrb[0].mxu0
      %v1478 = vadd.f32 %v1285, %v1477
      %v1479 = vpop.f32.mrb[0].mxu0
      %1480 = vmatprep.mubr.f32.mxu0 0.0
      %1481 = vmatmul.mubr.f32.gmra.mrb[0].mxu0 %v1361
      %v1482 = vpop.f32.mrb[0].mxu0
      %v1483 = vadd.f32 %v1290, %v1482
      %v1484 = vpop.f32.mrb[0].mxu0
      %1485 = vmatprep.mubr.f32.mxu0 0.0
      %1486 = vmatmul.mubr.f32.gmra.mrb[0].mxu0 %v1364
      %v1487 = vpop.f32.mrb[0].mxu0
      %v1488 = vadd.f32 %v1295, %v1487
      %v1489 = vpop.f32.mrb[0].mxu0
      %1490 = vmatprep.mubr.f32.mxu0 0.0
      %1491 = vmatmul.mubr.f32.gmra.mrb[0].mxu0 %v1367
      %v1492 = vpop.f32.mrb[0].mxu0
      %v1493 = vadd.f32 %v1300, %v1492
      %v1494 = vpop.f32.mrb[0].mxu0
      %1495 = vmatprep.mubr.f32.mxu0 0.0
      %1496 = vmatmul.mubr.f32.gmra.mrb[0].mxu0 %v1370
      %v1497 = vpop.f32.mrb[0].mxu0
      %v1498 = vadd.f32 %v1305, %v1497
      %v1499 = vpop.f32.mrb[0].mxu0
      %1500 = vmatprep.mubr.f32.mxu0 0.0
      %1501 = vmatmul.mubr.f32.gmra.mrb[0].mxu0 %v1373
      %v1502 = vpop.f32.mrb[0].mxu0
      %v1503 = vadd.f32 %v1310, %v1502
      %v1504 = vpop.f32.mrb[0].mxu0
      %1505 = vmatprep.mubr.f32.mxu0 0.0
      %1506 = vmatmul.mubr.f32.gmra.mrb[0].mxu0 %v1376
      %v1507 = vpop.f32.mrb[0].mxu0
      %v1508 = vadd.f32 %v1315, %v1507
      %v1509 = vpop.f32.mrb[0].mxu0
      %1510 = vmatprep.mubr.f32.mxu0 0.0
      %1511 = vmatmul.mubr.f32.gmra.mrb[0].mxu0 %v1379
      %v1512 = vpop.f32.mrb[0].mxu0
      %v1513 = vadd.f32 %v1320, %v1512
      %v1514 = vpop.f32.mrb[0].mxu0
      %1515 = vmatprep.mubr.f32.mxu0 0.0
      %1516 = vmatmul.mubr.f32.gmra.mrb[0].mxu0 %v1382
      %v1517 = vpop.f32.mrb[0].mxu0
      %v1518 = vadd.f32 %v1325, %v1517
      %v1519 = vpop.f32.mrb[0].mxu0
      %1520 = vmatprep.mubr.f32.mxu0 0.0
      %1521 = vmatmul.mubr.f32.gmra.mrb[0].mxu0 %v1385
      %v1522 = vpop.f32.mrb[0].mxu0
      %v1523 = vadd.f32 %v1330, %v1522
      %v1524 = vpop.f32.mrb[0].mxu0
      %1525 = vmatprep.mubr.f32.mxu0 0.0
      %1526 = vmatmul.mubr.f32.gmra.mrb[0].mxu0 %v1388
      %v1527 = vpop.f32.mrb[0].mxu0
      %v1528 = vadd.f32 %v1335, %v1527
      %v1529 = vpop.f32.mrb[0].mxu0
      %1530 = vmatprep.mubr.f32.mxu0 0.0
      %1531 = vmatmul.mubr.f32.gmra.mrb[0].mxu0 %v1391
      %v1532 = vpop.f32.mrb[0].mxu0
      %v1533 = vadd.f32 %v1340, %v1532
      %v1534 = vpop.f32.mrb[0].mxu0
      %1535 = vmatprep.mubr.f32.mxu0 0.0
      %1536 = vmatmul.mubr.f32.gmra.mrb[0].mxu0 %v1394
      %v1537 = vpop.f32.mrb[0].mxu0
      %v1538 = vadd.f32 %v1345, %v1537
      %v1539 = vpop.f32.mrb[0].mxu0
      %1540 = vdwg.mxu0
      %s1541 = scalar_lea.vmem %s4, 256
      %v1542 = vld [vmem:[%s1541] sm:$0xff]
      %v1543 = vld [vmem:[%s1541 + $0x8] sm:$0xff]
      %v1544 = vld [vmem:[%s1541 + $0x10] sm:$0xff]
      %v1545 = vld [vmem:[%s1541 + $0x18] sm:$0xff]
      %v1546 = vld [vmem:[%s1541 + $0x20] sm:$0xff]
      %v1547 = vld [vmem:[%s1541 + $0x28] sm:$0xff]
      %v1548 = vld [vmem:[%s1541 + $0x30] sm:$0xff]
      %v1549 = vld [vmem:[%s1541 + $0x38] sm:$0xff]
      %v1550 = vld [vmem:[%s1541 + $0x40] sm:$0xff]
      %v1551 = vld [vmem:[%s1541 + $0x48] sm:$0xff]
      %v1552 = vld [vmem:[%s1541 + $0x50] sm:$0xff]
      %v1553 = vld [vmem:[%s1541 + $0x58] sm:$0xff]
      %v1554 = vld [vmem:[%s1541 + $0x60] sm:$0xff]
      %v1555 = vld [vmem:[%s1541 + $0x68] sm:$0xff]
      %v1556 = vld [vmem:[%s1541 + $0x70] sm:$0xff]
      %v1557 = vld [vmem:[%s1541 + $0x78] sm:$0xff]
      %1566 = vrot.lane.b32.xlu0 %v1146, 126
      %v1567 = vpop.permute.xlu0 %1566
      %1568 = vrot.lane.b32.xlu0 %v1147, 126
      %v1569 = vpop.permute.xlu0 %1568
      %1570 = vrot.lane.b32.xlu0 %v1148, 126
      %v1571 = vpop.permute.xlu0 %1570
      %1572 = vrot.lane.b32.xlu0 %v1149, 126
      %v1573 = vpop.permute.xlu0 %1572
      %1574 = vrot.lane.b32.xlu0 %v1150, 126
      %v1575 = vpop.permute.xlu0 %1574
      %1576 = vrot.lane.b32.xlu0 %v1151, 126
      %v1577 = vpop.permute.xlu0 %1576
      %1578 = vrot.lane.b32.xlu0 %v1152, 126
      %v1579 = vpop.permute.xlu0 %1578
      %1580 = vrot.lane.b32.xlu0 %v1153, 126
      %v1581 = vpop.permute.xlu0 %1580
      %v1591 = vsel %vm1154, %v1542, 0
      %v1594 = vsel %vm1154, %v1543, 0
      %v1597 = vsel %vm1154, %v1544, 0
      %v1600 = vsel %vm1154, %v1545, 0
      %v1603 = vsel %vm1154, %v1546, 0
      %v1606 = vsel %vm1154, %v1547, 0
      %v1609 = vsel %vm1154, %v1548, 0
      %v1612 = vsel %vm1154, %v1549, 0
      %v1615 = vsel %vm1154, %v1550, 0
      %v1618 = vsel %vm1154, %v1551, 0
      %v1621 = vsel %vm1154, %v1552, 0
      %v1624 = vsel %vm1154, %v1553, 0
      %v1627 = vsel %vm1154, %v1554, 0
      %v1630 = vsel %vm1154, %v1555, 0
      %v1633 = vsel %vm1154, %v1556, 0
      %v1636 = vsel %vm1154, %v1557, 0
      %1638 = vmatprep.subr.mxu0 0.0
      %1639 = vmatpush1.msra.mxu0 %v1567
      %1640 = vmatprep.subr.mxu0 0.0
      %1641 = vmatpush1.msra.mxu0 %v1569
      %1642 = vmatprep.subr.mxu0 0.0
      %1643 = vmatpush1.msra.mxu0 %v1571
      %1644 = vmatprep.subr.mxu0 0.0
      %1645 = vmatpush1.msra.mxu0 %v1573
      %1646 = vmatprep.subr.mxu0 0.0
      %1647 = vmatpush1.msra.mxu0 %v1575
      %1648 = vmatprep.subr.mxu0 0.0
      %1649 = vmatpush1.msra.mxu0 %v1577
      %1650 = vmatprep.subr.mxu0 0.0
      %1651 = vmatpush1.msra.mxu0 %v1579
      %1652 = vmatprep.subr.mxu0 0.0
      %1653 = vmatpush1.msra.mxu0 %v1581
      %1654 = vmatprep.subr.mxu0 0.0
      %1655 = vmatpush1.msra.mxu0 0.0
      %1656 = vmatprep.subr.mxu0 0.0
      %1657 = vmatpush1.msra.mxu0 0.0
      %1658 = vmatprep.subr.mxu0 0.0
      %1659 = vmatpush1.msra.mxu0 0.0
      %1660 = vmatprep.subr.mxu0 0.0
      %1661 = vmatpush1.msra.mxu0 0.0
      %1662 = vmatprep.subr.mxu0 0.0
      %1663 = vmatpush1.msra.mxu0 0.0
      %1664 = vmatprep.subr.mxu0 0.0
      %1665 = vmatpush1.msra.mxu0 0.0
      %1666 = vmatprep.subr.mxu0 0.0
      %1667 = vmatpush1.msra.mxu0 0.0
      %1668 = vmatprep.subr.mxu0 0.0
      %1669 = vmatpush1.msra.mxu0 0.0
      %1670 = vmatprep.subr.mxu0 0.0
      %1671 = vmatpush1.msra.mxu0 0.0
      %1672 = vmatprep.subr.mxu0 0.0
      %1673 = vmatpush1.msra.mxu0 0.0
      %1674 = vmatprep.subr.mxu0 0.0
      %1675 = vmatpush1.msra.mxu0 0.0
      %1676 = vmatprep.subr.mxu0 0.0
      %1677 = vmatpush1.msra.mxu0 0.0
      %1678 = vmatprep.subr.mxu0 0.0
      %1679 = vmatpush1.msra.mxu0 0.0
      %1680 = vmatprep.subr.mxu0 0.0
      %1681 = vmatpush1.msra.mxu0 0.0
      %1682 = vmatprep.subr.mxu0 0.0
      %1683 = vmatpush1.msra.mxu0 0.0
      %1684 = vmatprep.subr.mxu0 0.0
      %1685 = vmatpush1.msra.mxu0 0.0
      %1686 = vmatprep.subr.mxu0 0.0
      %1687 = vmatpush1.msra.mxu0 0.0
      %1688 = vmatprep.subr.mxu0 0.0
      %1689 = vmatpush1.msra.mxu0 0.0
      %1690 = vmatprep.subr.mxu0 0.0
      %1691 = vmatpush1.msra.mxu0 0.0
      %1692 = vmatprep.subr.mxu0 0.0
      %1693 = vmatpush1.msra.mxu0 0.0
      %1694 = vmatprep.subr.mxu0 0.0
      %1695 = vmatpush1.msra.mxu0 0.0
      %1696 = vmatprep.subr.mxu0 0.0
      %1697 = vmatpush1.msra.mxu0 0.0
      %1698 = vmatprep.subr.mxu0 0.0
      %1699 = vmatpush1.msra.mxu0 0.0
      %1700 = vmatprep.subr.mxu0 0.0
      %1701 = vmatpush1.msra.mxu0 0.0
      %1702 = vmatprep.mubr.f32.mxu0 0.0
      %1703 = vmatmul.mubr.f32.gmra.mrb[0].mxu0 %v1591
      %v1704 = vpop.f32.mrb[0].mxu0
      %v1705 = vadd.f32 0.0, %v1704
      %v1706 = vpop.f32.mrb[0].mxu0
      %1707 = vmatprep.mubr.f32.mxu0 0.0
      %1708 = vmatmul.mubr.f32.gmra.mrb[0].mxu0 %v1594
      %v1709 = vpop.f32.mrb[0].mxu0
      %v1710 = vadd.f32 0.0, %v1709
      %v1711 = vpop.f32.mrb[0].mxu0
      %1712 = vmatprep.mubr.f32.mxu0 0.0
      %1713 = vmatmul.mubr.f32.gmra.mrb[0].mxu0 %v1597
      %v1714 = vpop.f32.mrb[0].mxu0
      %v1715 = vadd.f32 0.0, %v1714
      %v1716 = vpop.f32.mrb[0].mxu0
      %1717 = vmatprep.mubr.f32.mxu0 0.0
      %1718 = vmatmul.mubr.f32.gmra.mrb[0].mxu0 %v1600
      %v1719 = vpop.f32.mrb[0].mxu0
      %v1720 = vadd.f32 0.0, %v1719
      %v1721 = vpop.f32.mrb[0].mxu0
      %1722 = vmatprep.mubr.f32.mxu0 0.0
      %1723 = vmatmul.mubr.f32.gmra.mrb[0].mxu0 %v1603
      %v1724 = vpop.f32.mrb[0].mxu0
      %v1725 = vadd.f32 0.0, %v1724
      %v1726 = vpop.f32.mrb[0].mxu0
      %1727 = vmatprep.mubr.f32.mxu0 0.0
      %1728 = vmatmul.mubr.f32.gmra.mrb[0].mxu0 %v1606
      %v1729 = vpop.f32.mrb[0].mxu0
      %v1730 = vadd.f32 0.0, %v1729
      %v1731 = vpop.f32.mrb[0].mxu0
      %1732 = vmatprep.mubr.f32.mxu0 0.0
      %1733 = vmatmul.mubr.f32.gmra.mrb[0].mxu0 %v1609
      %v1734 = vpop.f32.mrb[0].mxu0
      %v1735 = vadd.f32 0.0, %v1734
      %v1736 = vpop.f32.mrb[0].mxu0
      %1737 = vmatprep.mubr.f32.mxu0 0.0
      %1738 = vmatmul.mubr.f32.gmra.mrb[0].mxu0 %v1612
      %v1739 = vpop.f32.mrb[0].mxu0
      %v1740 = vadd.f32 0.0, %v1739
      %v1741 = vpop.f32.mrb[0].mxu0
      %1742 = vmatprep.mubr.f32.mxu0 0.0
      %1743 = vmatmul.mubr.f32.gmra.mrb[0].mxu0 %v1615
      %v1744 = vpop.f32.mrb[0].mxu0
      %v1745 = vadd.f32 0.0, %v1744
      %v1746 = vpop.f32.mrb[0].mxu0
      %1747 = vmatprep.mubr.f32.mxu0 0.0
      %1748 = vmatmul.mubr.f32.gmra.mrb[0].mxu0 %v1618
      %v1749 = vpop.f32.mrb[0].mxu0
      %v1750 = vadd.f32 0.0, %v1749
      %v1751 = vpop.f32.mrb[0].mxu0
      %1752 = vmatprep.mubr.f32.mxu0 0.0
      %1753 = vmatmul.mubr.f32.gmra.mrb[0].mxu0 %v1621
      %v1754 = vpop.f32.mrb[0].mxu0
      %v1755 = vadd.f32 0.0, %v1754
      %v1756 = vpop.f32.mrb[0].mxu0
      %1757 = vmatprep.mubr.f32.mxu0 0.0
      %1758 = vmatmul.mubr.f32.gmra.mrb[0].mxu0 %v1624
      %v1759 = vpop.f32.mrb[0].mxu0
      %v1760 = vadd.f32 0.0, %v1759
      %v1761 = vpop.f32.mrb[0].mxu0
      %1762 = vmatprep.mubr.f32.mxu0 0.0
      %1763 = vmatmul.mubr.f32.gmra.mrb[0].mxu0 %v1627
      %v1764 = vpop.f32.mrb[0].mxu0
      %v1765 = vadd.f32 0.0, %v1764
      %v1766 = vpop.f32.mrb[0].mxu0
      %1767 = vmatprep.mubr.f32.mxu0 0.0
      %1768 = vmatmul.mubr.f32.gmra.mrb[0].mxu0 %v1630
      %v1769 = vpop.f32.mrb[0].mxu0
      %v1770 = vadd.f32 0.0, %v1769
      %v1771 = vpop.f32.mrb[0].mxu0
      %1772 = vmatprep.mubr.f32.mxu0 0.0
      %1773 = vmatmul.mubr.f32.gmra.mrb[0].mxu0 %v1633
      %v1774 = vpop.f32.mrb[0].mxu0
      %v1775 = vadd.f32 0.0, %v1774
      %v1776 = vpop.f32.mrb[0].mxu0
      %1777 = vmatprep.mubr.f32.mxu0 0.0
      %1778 = vmatmul.mubr.f32.gmra.mrb[0].mxu0 %v1636
      %v1779 = vpop.f32.mrb[0].mxu0
      %v1780 = vadd.f32 0.0, %v1779
      %v1781 = vpop.f32.mrb[0].mxu0
      %1782 = vdwg.mxu0
      %v1783 = vadd.f32 %v1463, %v1705
      %v1784 = vadd.f32 %v1468, %v1710
      %v1785 = vadd.f32 %v1473, %v1715
      %v1786 = vadd.f32 %v1478, %v1720
      %v1787 = vadd.f32 %v1483, %v1725
      %v1788 = vadd.f32 %v1488, %v1730
      %v1789 = vadd.f32 %v1493, %v1735
      %v1790 = vadd.f32 %v1498, %v1740
      %v1791 = vadd.f32 %v1503, %v1745
      %v1792 = vadd.f32 %v1508, %v1750
      %v1793 = vadd.f32 %v1513, %v1755
      %v1794 = vadd.f32 %v1518, %v1760
      %v1795 = vadd.f32 %v1523, %v1765
      %v1796 = vadd.f32 %v1528, %v1770
      %v1797 = vadd.f32 %v1533, %v1775
      %v1798 = vadd.f32 %v1538, %v1780
      %v1799 = vmax.f32 %v1783, 0.0
      %v1800 = vmax.f32 %v1784, 0.0
      %v1801 = vmax.f32 %v1785, 0.0
      %v1802 = vmax.f32 %v1786, 0.0
      %v1803 = vmax.f32 %v1787, 0.0
      %v1804 = vmax.f32 %v1788, 0.0
      %v1805 = vmax.f32 %v1789, 0.0
      %v1806 = vmax.f32 %v1790, 0.0
      %v1807 = vmax.f32 %v1791, 0.0
      %v1808 = vmax.f32 %v1792, 0.0
      %v1809 = vmax.f32 %v1793, 0.0
      %v1810 = vmax.f32 %v1794, 0.0
      %v1811 = vmax.f32 %v1795, 0.0
      %v1812 = vmax.f32 %v1796, 0.0
      %v1813 = vmax.f32 %v1797, 0.0
      %v1814 = vmax.f32 %v1798, 0.0
      %v1815 = vsel %vm542, %v1799, 0.0
      %1816 = vadd.xlane.f32.xlu0 %v1815
      %v1817 = vpop.xlane.xlu0 %1816
      %v1818 = vsel %vm542, %v1800, 0.0
      %1819 = vadd.xlane.f32.xlu0 %v1818
      %v1820 = vpop.xlane.xlu0 %1819
      %v1821 = vsel %vm542, %v1801, 0.0
      %1822 = vadd.xlane.f32.xlu0 %v1821
      %v1823 = vpop.xlane.xlu0 %1822
      %v1824 = vsel %vm542, %v1802, 0.0
      %1825 = vadd.xlane.f32.xlu0 %v1824
      %v1826 = vpop.xlane.xlu0 %1825
      %v1827 = vsel %vm542, %v1803, 0.0
      %1828 = vadd.xlane.f32.xlu0 %v1827
      %v1829 = vpop.xlane.xlu0 %1828
      %v1830 = vsel %vm542, %v1804, 0.0
      %1831 = vadd.xlane.f32.xlu0 %v1830
      %v1832 = vpop.xlane.xlu0 %1831
      %v1833 = vsel %vm542, %v1805, 0.0
      %1834 = vadd.xlane.f32.xlu0 %v1833
      %v1835 = vpop.xlane.xlu0 %1834
      %v1836 = vsel %vm542, %v1806, 0.0
      %1837 = vadd.xlane.f32.xlu0 %v1836
      %v1838 = vpop.xlane.xlu0 %1837
      %v1839 = vsel %vm542, %v1807, 0.0
      %1840 = vadd.xlane.f32.xlu0 %v1839
      %v1841 = vpop.xlane.xlu0 %1840
      %v1842 = vsel %vm542, %v1808, 0.0
      %1843 = vadd.xlane.f32.xlu0 %v1842
      %v1844 = vpop.xlane.xlu0 %1843
      %v1845 = vsel %vm542, %v1809, 0.0
      %1846 = vadd.xlane.f32.xlu0 %v1845
      %v1847 = vpop.xlane.xlu0 %1846
      %v1848 = vsel %vm542, %v1810, 0.0
      %1849 = vadd.xlane.f32.xlu0 %v1848
      %v1850 = vpop.xlane.xlu0 %1849
      %v1851 = vsel %vm542, %v1811, 0.0
      %1852 = vadd.xlane.f32.xlu0 %v1851
      %v1853 = vpop.xlane.xlu0 %1852
      %v1854 = vsel %vm542, %v1812, 0.0
      %1855 = vadd.xlane.f32.xlu0 %v1854
      %v1856 = vpop.xlane.xlu0 %1855
      %v1857 = vsel %vm542, %v1813, 0.0
      %1858 = vadd.xlane.f32.xlu0 %v1857
      %v1859 = vpop.xlane.xlu0 %1858
      %v1860 = vsel %vm542, %v1814, 0.0
      %1861 = vadd.xlane.f32.xlu0 %v1860
      %v1862 = vpop.xlane.xlu0 %1861
      %v1863 = vld [vmem:[%s5] sm:$0xff]
      %v1864 = vld [vmem:[%s5 + $0x8] sm:$0xf]
      %1865 = vmatprep.subr.mxu0 0.0
      %1866 = vmatpush1.msra.mxu0 %v1817
      %1867 = vmatprep.subr.mxu0 0.0
      %1868 = vmatpush1.msra.mxu0 %v1820
      %1869 = vmatprep.subr.mxu0 0.0
      %1870 = vmatpush1.msra.mxu0 %v1823
      %1871 = vmatprep.subr.mxu0 0.0
      %1872 = vmatpush1.msra.mxu0 %v1826
      %1873 = vmatprep.subr.mxu0 0.0
      %1874 = vmatpush1.msra.mxu0 %v1829
      %1875 = vmatprep.subr.mxu0 0.0
      %1876 = vmatpush1.msra.mxu0 %v1832
      %1877 = vmatprep.subr.mxu0 0.0
      %1878 = vmatpush1.msra.mxu0 %v1835
      %1879 = vmatprep.subr.mxu0 0.0
      %1880 = vmatpush1.msra.mxu0 %v1838
      %1881 = vmatprep.subr.mxu0 0.0
      %1882 = vmatpush1.msra.mxu0 %v1841
      %1883 = vmatprep.subr.mxu0 0.0
      %1884 = vmatpush1.msra.mxu0 %v1844
      %1885 = vmatprep.subr.mxu0 0.0
      %1886 = vmatpush1.msra.mxu0 %v1847
      %1887 = vmatprep.subr.mxu0 0.0
      %1888 = vmatpush1.msra.mxu0 %v1850
      %1889 = vmatprep.subr.mxu0 0.0
      %1890 = vmatpush1.msra.mxu0 %v1853
      %1891 = vmatprep.subr.mxu0 0.0
      %1892 = vmatpush1.msra.mxu0 %v1856
      %1893 = vmatprep.subr.mxu0 0.0
      %1894 = vmatpush1.msra.mxu0 %v1859
      %1895 = vmatprep.subr.mxu0 0.0
      %1896 = vmatpush1.msra.mxu0 %v1862
      %1897 = vmatprep.subr.mxu0 0.0
      %1898 = vmatpush1.msra.mxu0 0.0
      %1899 = vmatprep.subr.mxu0 0.0
      %1900 = vmatpush1.msra.mxu0 0.0
      %1901 = vmatprep.subr.mxu0 0.0
      %1902 = vmatpush1.msra.mxu0 0.0
      %1903 = vmatprep.subr.mxu0 0.0
      %1904 = vmatpush1.msra.mxu0 0.0
      %1905 = vmatprep.subr.mxu0 0.0
      %1906 = vmatpush1.msra.mxu0 0.0
      %1907 = vmatprep.subr.mxu0 0.0
      %1908 = vmatpush1.msra.mxu0 0.0
      %1909 = vmatprep.subr.mxu0 0.0
      %1910 = vmatpush1.msra.mxu0 0.0
      %1911 = vmatprep.subr.mxu0 0.0
      %1912 = vmatpush1.msra.mxu0 0.0
      %1913 = vmatprep.subr.mxu0 0.0
      %1914 = vmatpush1.msra.mxu0 0.0
      %1915 = vmatprep.subr.mxu0 0.0
      %1916 = vmatpush1.msra.mxu0 0.0
      %1917 = vmatprep.subr.mxu0 0.0
      %1918 = vmatpush1.msra.mxu0 0.0
      %1919 = vmatprep.subr.mxu0 0.0
      %1920 = vmatpush1.msra.mxu0 0.0
      %1921 = vmatprep.subr.mxu0 0.0
      %1922 = vmatpush1.msra.mxu0 0.0
      %1923 = vmatprep.subr.mxu0 0.0
      %1924 = vmatpush1.msra.mxu0 0.0
      %1925 = vmatprep.subr.mxu0 0.0
      %1926 = vmatpush1.msra.mxu0 0.0
      %1927 = vmatprep.subr.mxu0 0.0
      %1928 = vmatpush1.msra.mxu0 0.0
      %1929 = vmatprep.mubr.f32.mxu0 0.0
      %1930 = vmatmul.mubr.f32.gmra.mrb[0].mxu0 %v1863
      %v1931 = vpop.f32.mrb[0].mxu0
      %v1932 = vadd.f32 0.0, %v1931
      %v1933 = vpop.f32.mrb[0].mxu0
      %1934 = vmatprep.mubr.f32.mxu0 0.0
      %1935 = vmatmul.mubr.f32.gmra.mrb[0].mxu0 %v1864
      %v1936 = vpop.f32.mrb[0].mxu0
      %v1937 = vadd.f32 0.0, %v1936
      %v1938 = vpop.f32.mrb[0].mxu0
      %1939 = vdwg.mxu0
      %v1940 = vmul.f32 %v1932, 10.0
      %v1941 = vmul.f32 %v1937, 10.0
      %v1942 = vsel %vm647, %v1940, -inf
      %vm1943 = vcmask 3072
      %v1944 = vsel %vm1943, %v1941, -inf
      %v1945 = vmax.f32 %v1942, %v1944
      %v1946 = vrot.slane %v1945, 4
      %v1947 = vmax.f32 %v1945, %v1946
      %v1948 = vrot.slane %v1947, 2
      %v1949 = vmax.f32 %v1947, %v1948
      %v1950 = vrot.slane %v1949, 1
      %v1951 = vmax.f32 %v1949, %v1950
      %v1952 = vsub.f32 %v1940, %v1951
      %v1953 = vsub.f32 %v1941, %v1951
      %v1954 = vmul.f32 %v1952, 1.442695
      %v1955 = vpow.pop %v1954
      %v1956 = vmul.f32 %v1953, 1.442695
      %v1957 = vpow.pop %v1956
      %v1958 = vsel %vm647, %v1955, 0.0
      %v1959 = vsel %vm1943, %v1957, 0.0
      %v1960 = vadd.f32 %v1958, %v1959
      %v1961 = vrot.slane %v1960, 4
      %v1962 = vadd.f32 %v1960, %v1961
      %v1963 = vrot.slane %v1962, 2
      %v1964 = vadd.f32 %v1962, %v1963
      %v1965 = vrot.slane %v1964, 1
      %v1966 = vadd.f32 %v1964, %v1965
      %v1967 = vrcp.pop %v1966
      %v1968 = vmul.f32 %v1955, %v1967
      %v1969 = vmul.f32 %v1957, %v1967
      %1970 = vst.msk [vmem:[%s304] sm:$0xff] %vm647, %v1968
      %1971 = vst.msk [vmem:[%s304 + $0x8] sm:$0xf] %vm1943, %v1969
      %p1972 = scmp.lt.s32.totalorder %s31, 5
      %s1973 = scalar_select %p1972, %s31, 5
      %s1974 = smul.addr %s1973, 2
      %s1975 = smul.addr %s1974, 8
      %s1976 = scalar_lea.vmem %s8, %s1975
      %p1977 = scmp.lt.s32.totalorder %s31, 5
      %s1978 = scalar_select %p1977, %s31, 5
      %s1979 = smul.addr %s1978, 2
      %s1980 = scalar_lea.vmem %s9, %s1979
      // Predicated region
      $region45: #{stone_forward.41} parent=43 // pred_check
        %p1981 = pneg %p182
      $region46: #{stone_forward.41} parent=43 // pred_check_branch
        %1983 = sbr.rel (%p1981) target = $region48
      $region47: #{stone_forward.41} parent=43 // pred_region
        _
      $region48: #{stone_forward.41} parent=43 // pred_fallthru
        _
      // Predicated region
      $region49: #{stone_forward.41} parent=43 // pred_check
        %p1984 = pneg %p208
      $region50: #{stone_forward.41} parent=43 // pred_check_branch
        %1986 = sbr.rel (%p1984) target = $region52
      $region51: #{stone_forward.41} parent=43 // pred_region
        _
      $region52: #{stone_forward.41} parent=43 // pred_fallthru
        _
    $region44: #{stone_forward.41} parent=5 // pred_fallthru
      _
    %p1987 = scmp.le.s32.totalorder 2, %s26
    // Predicated region
    $region53: #{stone_forward.41} parent=5 // pred_check
      %p1988 = pneg %p1987
    $region54: #{stone_forward.41} parent=5 // pred_check_branch
      %1990 = sbr.rel (%p1988) target = $region56
    $region55: #{stone_forward.41} parent=5 // pred_region
      %s1991 = ssub.s32 %s26, 2
      // Predicated region
      $region57: #{stone_forward.41} parent=55 // pred_check
        %p1992 = pneg %p188
      $region58: #{stone_forward.41} parent=55 // pred_check_branch
        %1994 = sbr.rel (%p1992) target = $region60
      $region59: #{stone_forward.41} parent=55 // pred_region
        %p1995 = scmp.lt.s32.totalorder %s32, 5
        %s1996 = scalar_select %p1995, %s32, 5
        %s1997 = smul.addr %s1996, 2
        %s1998 = smul.addr %s1997, 8
        %s1999 = scalar_lea.vmem %s8, %s1998
      $region60: #{stone_forward.41} parent=55 // pred_fallthru
        _
      // Predicated region
      $region61: #{stone_forward.41} parent=55 // pred_check
        %p2000 = pneg %p214
      $region62: #{stone_forward.41} parent=55 // pred_check_branch
        %2002 = sbr.rel (%p2000) target = $region64
      $region63: #{stone_forward.41} parent=55 // pred_region
        %p2003 = scmp.lt.s32.totalorder %s32, 5
        %s2004 = scalar_select %p2003, %s32, 5
        %s2005 = smul.addr %s2004, 2
        %s2006 = scalar_lea.vmem %s9, %s2005
      $region64: #{stone_forward.41} parent=55 // pred_fallthru
        _
    $region56: #{stone_forward.41} parent=5 // pred_fallthru
      _
  $region6: #{stone_forward.41} parent=0 // loop_footer
    %s30 = sadd.s32 1, %s26
  $region7: #{stone_forward.41} parent=0 // loop_footer_branch
    %25 = sbr.rel target = $region3
  $region8: #{stone_forward.41} parent=0 // loop_exit
    _

</llo_original>
